<compile_context>
chip_gen: v7x
topology: tpu7x:2x2x1
jax: 0.10.0
libtpu: 0.0.40
codegen_flags: <defaults>
</compile_context>

<pallas_src>
import jax
import jax.numpy as jnp
import numpy as np
from jax.experimental import pallas as pl
from jax.experimental.pallas import tpu as pltpu


def lstm_kernel(x_ref, wih1_ref, whh1_ref, b1_ref,
                wih2_ref, whh2_ref, b2_ref,
                wfc_ref, bfc_ref,
                out_ref):
    T = x_ref.shape[0]            # static (compile-time) sequence length
    H = whh1_ref.shape[0]         # hidden size; 4*H = 128 lanes here (one vreg span)
    f32, bf16 = jnp.float32, jnp.bfloat16

    # Hoisted lane mask selecting the `g` gate span (lanes [2H, 3H)) of the packed
    # (i|f|g|o) gate vector.  Lets the cell run one full-vreg sigmoid + one full-vreg
    # tanh per step instead of four sub-vreg activations.
    lane = jax.lax.broadcasted_iota(jnp.int32, (1, 4 * H), 1)
    g_mask = (lane >= 2 * H) & (lane < 3 * H)

    def cell(gates, c):
        # gates: (1, 4H) f32 pre-activations in torch gate order (i, f, g, o).
        act = jnp.where(g_mask, jnp.tanh(gates), jax.nn.sigmoid(gates))
        i = act[:, 0 * H:1 * H]
        f = act[:, 1 * H:2 * H]
        g = act[:, 2 * H:3 * H]
        o = act[:, 3 * H:4 * H]
        c_new = f * c + i * g
        h_new = o * jnp.tanh(c_new)
        return h_new, c_new

    # Loop-invariant recurrent weights (bf16 MXU operands), read once so the MXU RHS
    # stays stationary across the unrolled timesteps.
    whh1 = whh1_ref[...]
    wih2 = wih2_ref[...]
    whh2 = whh2_ref[...]
    wfc = wfc_ref[...]
    b2 = b2_ref[...]
    bfc = bfc_ref[...]

    # ---- layer 1: batched input projection for the whole sequence (one MXU matmul) --
    gates1 = jnp.dot(x_ref[...].astype(bf16), wih1_ref[...],
                     preferred_element_type=f32) + b1_ref[...]

    h = jnp.zeros((1, H), f32)
    c = jnp.zeros((1, H), f32)
    g2_rows = []
    # Fully unrolled recurrence: T = 8 here, so the LLO scheduler sees the whole
    # latency chain.  For long sequences, switch to lax.fori_loop(..., unroll=4..8)
    # with (h, c) carries and VMEM scratch instead of Python lists.
    for t in range(T):
        g_t = gates1[t:t + 1, :] + jnp.dot(h.astype(bf16), whh1,
                                           preferred_element_type=f32)
        h, c = cell(g_t, c)
        # Layer-2 input projection for step t: independent of layer-1's recurrence
        # chain, so it is free filler under the serial dependence.
        g2_rows.append(jnp.dot(h.astype(bf16), wih2, preferred_element_type=f32) + b2)

    # ---- layer 2 ---------------------------------------------------------------------
    # Layer 2 is intentionally seeded with layer 1's FINAL (h, c): the PyTorch module
    # passes self.hidden from lstm1 straight into lstm2.  This also means the two
    # recurrences cannot be skew-pipelined — do not "optimize" this dependence away.
    out_rows = []
    for t in range(T):
        g_t = g2_rows[t] + jnp.dot(h.astype(bf16), whh2, preferred_element_type=f32)
        h, c = cell(g_t, c)
        # FC head row for step t — also off the recurrence chain.
        out_rows.append(jnp.dot(h.astype(bf16), wfc, preferred_element_type=f32) + bfc)

    # Single lane-dense, full-tile store (T x 128).
    out_ref[...] = jnp.concatenate(out_rows, axis=0)


# ----------------------------- wrapper & one-time param prep -------------------------

def prepare_params(p):
    """One-time conversion to the kernel layout (hoisted out of the per-call path):
    weights cast to bf16 MXU-operand dtype, FC output columns padded to a 128-lane
    multiple, biases kept f32.  No per-forward padding remains."""
    H = p["whh1"].shape[0]
    out_size = p["wfc"].shape[1]
    out_pad = ((out_size + 127) // 128) * 128
    wfc_p = jnp.zeros((H, out_pad), jnp.bfloat16).at[:, :out_size].set(
        p["wfc"].astype(jnp.bfloat16))
    bfc_p = jnp.zeros((1, out_pad), jnp.float32).at[:, :out_size].set(p["bfc"])
    return dict(
        wih1=p["wih1"].astype(jnp.bfloat16),
        whh1=p["whh1"].astype(jnp.bfloat16),
        b1=p["b1"].astype(jnp.float32),
        wih2=p["wih2"].astype(jnp.bfloat16),
        whh2=p["whh2"].astype(jnp.bfloat16),
        b2=p["b2"].astype(jnp.float32),
        wfc=wfc_p,
        bfc=bfc_p,
        out_size=out_size,   # python int, used only for the final wrapper slice
    )


def lstm_forward(x, q):
    """x: (seq_len, input_size) f32.  q: output of prepare_params()."""
    T = x.shape[0]
    out_pad = q["wfc"].shape[1]
    out_padded = pl.pallas_call(
        lstm_kernel,
        out_shape=jax.ShapeDtypeStruct((T, out_pad), jnp.float32),
        in_specs=[pl.BlockSpec(memory_space=pltpu.MemorySpace.VMEM)] * 9,
        out_specs=pl.BlockSpec(memory_space=pltpu.MemorySpace.VMEM),
    )(x, q["wih1"], q["whh1"], q["b1"], q["wih2"], q["whh2"], q["b2"],
      q["wfc"], q["bfc"])
    return out_padded[:, :q["out_size"]]


def init_params(key, input_size, hidden_size, output_size):
    k = 1.0 / np.sqrt(hidden_size)
    ks = jax.random.split(key, 10)
    u = lambda kk, shape: jax.random.uniform(kk, shape, jnp.float32, -k, k)
    return dict(
        wih1=u(ks[0], (input_size, 4 * hidden_size)),
        whh1=u(ks[1], (hidden_size, 4 * hidden_size)),
        b1=u(ks[2], (1, 4 * hidden_size)) + u(ks[3], (1, 4 * hidden_size)),
        wih2=u(ks[4], (hidden_size, 4 * hidden_size)),
        whh2=u(ks[5], (hidden_size, 4 * hidden_size)),
        b2=u(ks[6], (1, 4 * hidden_size)) + u(ks[7], (1, 4 * hidden_size)),
        wfc=u(ks[8], (hidden_size, output_size)),
        bfc=u(ks[9], (1, output_size)),
    )


def lstm_ref(x, p):
    """Pure-JAX f32 reference with identical semantics (correctness check)."""
    H = p["whh1"].shape[0]

    def cell(x_t, h, c, wih, whh, b):
        gates = x_t @ wih + h @ whh + b
        i = jax.nn.sigmoid(gates[:, :H])
        f = jax.nn.sigmoid(gates[:, H:2 * H])
        g = jnp.tanh(gates[:, 2 * H:3 * H])
        o = jax.nn.sigmoid(gates[:, 3 * H:])
        c = f * c + i * g
        h = o * jnp.tanh(c)
        return h, c

    h = jnp.zeros((1, H), jnp.float32)
    c = jnp.zeros((1, H), jnp.float32)
    outs1 = []
    for t in range(x.shape[0]):
        h, c = cell(x[t:t + 1], h, c, p["wih1"], p["whh1"], p["b1"])
        outs1.append(h)
    out1 = jnp.concatenate(outs1, axis=0)
    outs2 = []
    for t in range(x.shape[0]):
        h, c = cell(out1[t:t + 1], h, c, p["wih2"], p["whh2"], p["b2"])
        outs2.append(h)
    out2 = jnp.concatenate(outs2, axis=0)
    return out2 @ p["wfc"] + p["bfc"]


if __name__ == "__main__":
    seq_len, input_size, hidden_size, output_size = 8, 8, 32, 1

    key = jax.random.PRNGKey(0)
    kx, kp = jax.random.split(key)
    x = jax.random.normal(kx, (seq_len, input_size), dtype=jnp.float32)
    params = init_params(kp, input_size, hidden_size, output_size)

    prepared = prepare_params(params)   # one-time layout/bf16 prep, not per-forward

    out = lstm_forward(x, prepared)
    out = jax.block_until_ready(out)

    ref = jax.block_until_ready(lstm_ref(x, params))
    # bf16 MXU operands (f32 accumulation / cell state): loosen tolerance vs f32 ref.
    np.testing.assert_allclose(np.asarray(out), np.asarray(ref), rtol=5e-2, atol=5e-2)

    print("KERNEL_OK")
</pallas_src>

<mosaic_0001>
module attributes {stable_mosaic.version = 11 : i64} {
  func.func @lstm_kernel(%arg0: memref<8x8xf32, #tpu.memory_space<vmem>>, %arg1: memref<8x128xbf16, #tpu.memory_space<vmem>>, %arg2: memref<32x128xbf16, #tpu.memory_space<vmem>>, %arg3: memref<1x128xf32, #tpu.memory_space<vmem>>, %arg4: memref<32x128xbf16, #tpu.memory_space<vmem>>, %arg5: memref<32x128xbf16, #tpu.memory_space<vmem>>, %arg6: memref<1x128xf32, #tpu.memory_space<vmem>>, %arg7: memref<32x128xbf16, #tpu.memory_space<vmem>>, %arg8: memref<1x128xf32, #tpu.memory_space<vmem>>, %arg9: memref<8x128xf32, #tpu.memory_space<vmem>>) attributes {dimension_semantics = [], scalar_prefetch = 0 : i64, scratch_operands = 0 : i64, tpu.core_type = #tpu.core_type<tc>} {
    %0 = tpu.iota {dimensions = array<i32: 1>} : vector<1x128xi32>
    %c64_i32 = arith.constant 64 : i32
    %1 = vector.broadcast %c64_i32 : i32 to vector<1x128xi32>
    %2 = arith.cmpi sge, %0, %1 : vector<1x128xi32>
    %c96_i32 = arith.constant 96 : i32
    %3 = vector.broadcast %c96_i32 : i32 to vector<1x128xi32>
    %4 = arith.cmpi slt, %0, %3 : vector<1x128xi32>
    %5 = arith.andi %2, %4 : vector<1x128xi1>
    %c0 = arith.constant 0 : index
    %c0_0 = arith.constant 0 : index
    %6 = vector.load %arg2[%c0, %c0_0] : memref<32x128xbf16, #tpu.memory_space<vmem>>, vector<32x128xbf16>
    %c0_1 = arith.constant 0 : index
    %c0_2 = arith.constant 0 : index
    %7 = vector.load %arg4[%c0_1, %c0_2] : memref<32x128xbf16, #tpu.memory_space<vmem>>, vector<32x128xbf16>
    %c0_3 = arith.constant 0 : index
    %c0_4 = arith.constant 0 : index
    %8 = vector.load %arg5[%c0_3, %c0_4] : memref<32x128xbf16, #tpu.memory_space<vmem>>, vector<32x128xbf16>
    %c0_5 = arith.constant 0 : index
    %c0_6 = arith.constant 0 : index
    %9 = vector.load %arg7[%c0_5, %c0_6] : memref<32x128xbf16, #tpu.memory_space<vmem>>, vector<32x128xbf16>
    %c0_7 = arith.constant 0 : index
    %c0_8 = arith.constant 0 : index
    %10 = vector.load %arg6[%c0_7, %c0_8] : memref<1x128xf32, #tpu.memory_space<vmem>>, vector<1x128xf32>
    %c0_9 = arith.constant 0 : index
    %c0_10 = arith.constant 0 : index
    %11 = vector.load %arg8[%c0_9, %c0_10] : memref<1x128xf32, #tpu.memory_space<vmem>>, vector<1x128xf32>
    %c0_11 = arith.constant 0 : index
    %c0_12 = arith.constant 0 : index
    %12 = vector.load %arg0[%c0_11, %c0_12] : memref<8x8xf32, #tpu.memory_space<vmem>>, vector<8x8xf32>
    %13 = arith.truncf %12 : vector<8x8xf32> to vector<8x8xbf16>
    %c0_13 = arith.constant 0 : index
    %c0_14 = arith.constant 0 : index
    %14 = vector.load %arg1[%c0_13, %c0_14] : memref<8x128xbf16, #tpu.memory_space<vmem>>, vector<8x128xbf16>
    %cst = arith.constant dense<0.000000e+00> : vector<8x128xf32>
    %15 = tpu.matmul %13, %14, %cst {dimension_numbers = #tpu.dot_dimension_numbers<[1], [0], [0], [1], [0, 0, 1, 1], [], []>} : vector<8x8xbf16>, vector<8x128xbf16>, vector<8x128xf32> -> vector<8x128xf32>
    %c0_15 = arith.constant 0 : index
    %c0_16 = arith.constant 0 : index
    %16 = vector.load %arg3[%c0_15, %c0_16] : memref<1x128xf32, #tpu.memory_space<vmem>>, vector<1x128xf32>
    %17 = vector.broadcast %16 : vector<1x128xf32> to vector<8x128xf32>
    %18 = arith.addf %15, %17 : vector<8x128xf32>
    %cst_17 = arith.constant 0.000000e+00 : f32
    %19 = vector.broadcast %cst_17 : f32 to vector<1x32xf32>
    %cst_18 = arith.constant 0.000000e+00 : f32
    %20 = vector.broadcast %cst_18 : f32 to vector<1x32xf32>
    %21 = vector.extract_strided_slice %18 {offsets = [0, 0], sizes = [1, 128], strides = [1, 1]} : vector<8x128xf32> to vector<1x128xf32>
    %22 = arith.truncf %19 : vector<1x32xf32> to vector<1x32xbf16>
    %cst_19 = arith.constant dense<0.000000e+00> : vector<1x128xf32>
    %23 = tpu.matmul %22, %6, %cst_19 {dimension_numbers = #tpu.dot_dimension_numbers<[1], [0], [0], [1], [0, 0, 1, 1], [], []>} : vector<1x32xbf16>, vector<32x128xbf16>, vector<1x128xf32> -> vector<1x128xf32>
    %24 = arith.addf %21, %23 : vector<1x128xf32>
    %25 = math.tanh %24 : vector<1x128xf32>
    %26 = arith.negf %24 : vector<1x128xf32>
    %27 = math.exp %26 : vector<1x128xf32>
    %cst_20 = arith.constant 1.000000e+00 : f32
    %28 = vector.broadcast %cst_20 : f32 to vector<1x128xf32>
    %29 = arith.addf %28, %27 : vector<1x128xf32>
    %30 = arith.divf %28, %29 : vector<1x128xf32>
    %31 = arith.select %5, %25, %30 : vector<1x128xi1>, vector<1x128xf32>
    %32 = vector.extract_strided_slice %31 {offsets = [0, 0], sizes = [1, 32], strides = [1, 1]} : vector<1x128xf32> to vector<1x32xf32>
    %33 = vector.extract_strided_slice %31 {offsets = [0, 32], sizes = [1, 32], strides = [1, 1]} : vector<1x128xf32> to vector<1x32xf32>
    %34 = vector.extract_strided_slice %31 {offsets = [0, 64], sizes = [1, 32], strides = [1, 1]} : vector<1x128xf32> to vector<1x32xf32>
    %35 = vector.extract_strided_slice %31 {offsets = [0, 96], sizes = [1, 32], strides = [1, 1]} : vector<1x128xf32> to vector<1x32xf32>
    %36 = arith.mulf %33, %20 : vector<1x32xf32>
    %37 = arith.mulf %32, %34 : vector<1x32xf32>
    %38 = arith.addf %36, %37 : vector<1x32xf32>
    %39 = math.tanh %38 : vector<1x32xf32>
    %40 = arith.mulf %35, %39 : vector<1x32xf32>
    %41 = arith.truncf %40 : vector<1x32xf32> to vector<1x32xbf16>
    %cst_21 = arith.constant dense<0.000000e+00> : vector<1x128xf32>
    %42 = tpu.matmul %41, %7, %cst_21 {dimension_numbers = #tpu.dot_dimension_numbers<[1], [0], [0], [1], [0, 0, 1, 1], [], []>} : vector<1x32xbf16>, vector<32x128xbf16>, vector<1x128xf32> -> vector<1x128xf32>
    %43 = arith.addf %42, %10 : vector<1x128xf32>
    %44 = vector.extract_strided_slice %18 {offsets = [1, 0], sizes = [1, 128], strides = [1, 1]} : vector<8x128xf32> to vector<1x128xf32>
    %45 = arith.truncf %40 : vector<1x32xf32> to vector<1x32xbf16>
    %cst_22 = arith.constant dense<0.000000e+00> : vector<1x128xf32>
    %46 = tpu.matmul %45, %6, %cst_22 {dimension_numbers = #tpu.dot_dimension_numbers<[1], [0], [0], [1], [0, 0, 1, 1], [], []>} : vector<1x32xbf16>, vector<32x128xbf16>, vector<1x128xf32> -> vector<1x128xf32>
    %47 = arith.addf %44, %46 : vector<1x128xf32>
    %48 = math.tanh %47 : vector<1x128xf32>
    %49 = arith.negf %47 : vector<1x128xf32>
    %50 = math.exp %49 : vector<1x128xf32>
    %cst_23 = arith.constant 1.000000e+00 : f32
    %51 = vector.broadcast %cst_23 : f32 to vector<1x128xf32>
    %52 = arith.addf %51, %50 : vector<1x128xf32>
    %53 = arith.divf %51, %52 : vector<1x128xf32>
    %54 = arith.select %5, %48, %53 : vector<1x128xi1>, vector<1x128xf32>
    %55 = vector.extract_strided_slice %54 {offsets = [0, 0], sizes = [1, 32], strides = [1, 1]} : vector<1x128xf32> to vector<1x32xf32>
    %56 = vector.extract_strided_slice %54 {offsets = [0, 32], sizes = [1, 32], strides = [1, 1]} : vector<1x128xf32> to vector<1x32xf32>
    %57 = vector.extract_strided_slice %54 {offsets = [0, 64], sizes = [1, 32], strides = [1, 1]} : vector<1x128xf32> to vector<1x32xf32>
    %58 = vector.extract_strided_slice %54 {offsets = [0, 96], sizes = [1, 32], strides = [1, 1]} : vector<1x128xf32> to vector<1x32xf32>
    %59 = arith.mulf %56, %38 : vector<1x32xf32>
    %60 = arith.mulf %55, %57 : vector<1x32xf32>
    %61 = arith.addf %59, %60 : vector<1x32xf32>
    %62 = math.tanh %61 : vector<1x32xf32>
    %63 = arith.mulf %58, %62 : vector<1x32xf32>
    %64 = arith.truncf %63 : vector<1x32xf32> to vector<1x32xbf16>
    %cst_24 = arith.constant dense<0.000000e+00> : vector<1x128xf32>
    %65 = tpu.matmul %64, %7, %cst_24 {dimension_numbers = #tpu.dot_dimension_numbers<[1], [0], [0], [1], [0, 0, 1, 1], [], []>} : vector<1x32xbf16>, vector<32x128xbf16>, vector<1x128xf32> -> vector<1x128xf32>
    %66 = arith.addf %65, %10 : vector<1x128xf32>
    %67 = vector.extract_strided_slice %18 {offsets = [2, 0], sizes = [1, 128], strides = [1, 1]} : vector<8x128xf32> to vector<1x128xf32>
    %68 = arith.truncf %63 : vector<1x32xf32> to vector<1x32xbf16>
    %cst_25 = arith.constant dense<0.000000e+00> : vector<1x128xf32>
    %69 = tpu.matmul %68, %6, %cst_25 {dimension_numbers = #tpu.dot_dimension_numbers<[1], [0], [0], [1], [0, 0, 1, 1], [], []>} : vector<1x32xbf16>, vector<32x128xbf16>, vector<1x128xf32> -> vector<1x128xf32>
    %70 = arith.addf %67, %69 : vector<1x128xf32>
    %71 = math.tanh %70 : vector<1x128xf32>
    %72 = arith.negf %70 : vector<1x128xf32>
    %73 = math.exp %72 : vector<1x128xf32>
    %cst_26 = arith.constant 1.000000e+00 : f32
    %74 = vector.broadcast %cst_26 : f32 to vector<1x128xf32>
    %75 = arith.addf %74, %73 : vector<1x128xf32>
    %76 = arith.divf %74, %75 : vector<1x128xf32>
    %77 = arith.select %5, %71, %76 : vector<1x128xi1>, vector<1x128xf32>
    %78 = vector.extract_strided_slice %77 {offsets = [0, 0], sizes = [1, 32], strides = [1, 1]} : vector<1x128xf32> to vector<1x32xf32>
    %79 = vector.extract_strided_slice %77 {offsets = [0, 32], sizes = [1, 32], strides = [1, 1]} : vector<1x128xf32> to vector<1x32xf32>
    %80 = vector.extract_strided_slice %77 {offsets = [0, 64], sizes = [1, 32], strides = [1, 1]} : vector<1x128xf32> to vector<1x32xf32>
    %81 = vector.extract_strided_slice %77 {offsets = [0, 96], sizes = [1, 32], strides = [1, 1]} : vector<1x128xf32> to vector<1x32xf32>
    %82 = arith.mulf %79, %61 : vector<1x32xf32>
    %83 = arith.mulf %78, %80 : vector<1x32xf32>
    %84 = arith.addf %82, %83 : vector<1x32xf32>
    %85 = math.tanh %84 : vector<1x32xf32>
    %86 = arith.mulf %81, %85 : vector<1x32xf32>
    %87 = arith.truncf %86 : vector<1x32xf32> to vector<1x32xbf16>
    %cst_27 = arith.constant dense<0.000000e+00> : vector<1x128xf32>
    %88 = tpu.matmul %87, %7, %cst_27 {dimension_numbers = #tpu.dot_dimension_numbers<[1], [0], [0], [1], [0, 0, 1, 1], [], []>} : vector<1x32xbf16>, vector<32x128xbf16>, vector<1x128xf32> -> vector<1x128xf32>
    %89 = arith.addf %88, %10 : vector<1x128xf32>
    %90 = vector.extract_strided_slice %18 {offsets = [3, 0], sizes = [1, 128], strides = [1, 1]} : vector<8x128xf32> to vector<1x128xf32>
    %91 = arith.truncf %86 : vector<1x32xf32> to vector<1x32xbf16>
    %cst_28 = arith.constant dense<0.000000e+00> : vector<1x128xf32>
    %92 = tpu.matmul %91, %6, %cst_28 {dimension_numbers = #tpu.dot_dimension_numbers<[1], [0], [0], [1], [0, 0, 1, 1], [], []>} : vector<1x32xbf16>, vector<32x128xbf16>, vector<1x128xf32> -> vector<1x128xf32>
    %93 = arith.addf %90, %92 : vector<1x128xf32>
    %94 = math.tanh %93 : vector<1x128xf32>
    %95 = arith.negf %93 : vector<1x128xf32>
    %96 = math.exp %95 : vector<1x128xf32>
    %cst_29 = arith.constant 1.000000e+00 : f32
    %97 = vector.broadcast %cst_29 : f32 to vector<1x128xf32>
    %98 = arith.addf %97, %96 : vector<1x128xf32>
    %99 = arith.divf %97, %98 : vector<1x128xf32>
    %100 = arith.select %5, %94, %99 : vector<1x128xi1>, vector<1x128xf32>
    %101 = vector.extract_strided_slice %100 {offsets = [0, 0], sizes = [1, 32], strides = [1, 1]} : vector<1x128xf32> to vector<1x32xf32>
    %102 = vector.extract_strided_slice %100 {offsets = [0, 32], sizes = [1, 32], strides = [1, 1]} : vector<1x128xf32> to vector<1x32xf32>
    %103 = vector.extract_strided_slice %100 {offsets = [0, 64], sizes = [1, 32], strides = [1, 1]} : vector<1x128xf32> to vector<1x32xf32>
    %104 = vector.extract_strided_slice %100 {offsets = [0, 96], sizes = [1, 32], strides = [1, 1]} : vector<1x128xf32> to vector<1x32xf32>
    %105 = arith.mulf %102, %84 : vector<1x32xf32>
    %106 = arith.mulf %101, %103 : vector<1x32xf32>
    %107 = arith.addf %105, %106 : vector<1x32xf32>
    %108 = math.tanh %107 : vector<1x32xf32>
    %109 = arith.mulf %104, %108 : vector<1x32xf32>
    %110 = arith.truncf %109 : vector<1x32xf32> to vector<1x32xbf16>
    %cst_30 = arith.constant dense<0.000000e+00> : vector<1x128xf32>
    %111 = tpu.matmul %110, %7, %cst_30 {dimension_numbers = #tpu.dot_dimension_numbers<[1], [0], [0], [1], [0, 0, 1, 1], [], []>} : vector<1x32xbf16>, vector<32x128xbf16>, vector<1x128xf32> -> vector<1x128xf32>
    %112 = arith.addf %111, %10 : vector<1x128xf32>
    %113 = vector.extract_strided_slice %18 {offsets = [4, 0], sizes = [1, 128], strides = [1, 1]} : vector<8x128xf32> to vector<1x128xf32>
    %114 = arith.truncf %109 : vector<1x32xf32> to vector<1x32xbf16>
    %cst_31 = arith.constant dense<0.000000e+00> : vector<1x128xf32>
    %115 = tpu.matmul %114, %6, %cst_31 {dimension_numbers = #tpu.dot_dimension_numbers<[1], [0], [0], [1], [0, 0, 1, 1], [], []>} : vector<1x32xbf16>, vector<32x128xbf16>, vector<1x128xf32> -> vector<1x128xf32>
    %116 = arith.addf %113, %115 : vector<1x128xf32>
    %117 = math.tanh %116 : vector<1x128xf32>
    %118 = arith.negf %116 : vector<1x128xf32>
    %119 = math.exp %118 : vector<1x128xf32>
    %cst_32 = arith.constant 1.000000e+00 : f32
    %120 = vector.broadcast %cst_32 : f32 to vector<1x128xf32>
    %121 = arith.addf %120, %119 : vector<1x128xf32>
    %122 = arith.divf %120, %121 : vector<1x128xf32>
    %123 = arith.select %5, %117, %122 : vector<1x128xi1>, vector<1x128xf32>
    %124 = vector.extract_strided_slice %123 {offsets = [0, 0], sizes = [1, 32], strides = [1, 1]} : vector<1x128xf32> to vector<1x32xf32>
    %125 = vector.extract_strided_slice %123 {offsets = [0, 32], sizes = [1, 32], strides = [1, 1]} : vector<1x128xf32> to vector<1x32xf32>
    %126 = vector.extract_strided_slice %123 {offsets = [0, 64], sizes = [1, 32], strides = [1, 1]} : vector<1x128xf32> to vector<1x32xf32>
    %127 = vector.extract_strided_slice %123 {offsets = [0, 96], sizes = [1, 32], strides = [1, 1]} : vector<1x128xf32> to vector<1x32xf32>
    %128 = arith.mulf %125, %107 : vector<1x32xf32>
    %129 = arith.mulf %124, %126 : vector<1x32xf32>
    %130 = arith.addf %128, %129 : vector<1x32xf32>
    %131 = math.tanh %130 : vector<1x32xf32>
    %132 = arith.mulf %127, %131 : vector<1x32xf32>
    %133 = arith.truncf %132 : vector<1x32xf32> to vector<1x32xbf16>
    %cst_33 = arith.constant dense<0.000000e+00> : vector<1x128xf32>
    %134 = tpu.matmul %133, %7, %cst_33 {dimension_numbers = #tpu.dot_dimension_numbers<[1], [0], [0], [1], [0, 0, 1, 1], [], []>} : vector<1x32xbf16>, vector<32x128xbf16>, vector<1x128xf32> -> vector<1x128xf32>
    %135 = arith.addf %134, %10 : vector<1x128xf32>
    %136 = vector.extract_strided_slice %18 {offsets = [5, 0], sizes = [1, 128], strides = [1, 1]} : vector<8x128xf32> to vector<1x128xf32>
    %137 = arith.truncf %132 : vector<1x32xf32> to vector<1x32xbf16>
    %cst_34 = arith.constant dense<0.000000e+00> : vector<1x128xf32>
    %138 = tpu.matmul %137, %6, %cst_34 {dimension_numbers = #tpu.dot_dimension_numbers<[1], [0], [0], [1], [0, 0, 1, 1], [], []>} : vector<1x32xbf16>, vector<32x128xbf16>, vector<1x128xf32> -> vector<1x128xf32>
    %139 = arith.addf %136, %138 : vector<1x128xf32>
    %140 = math.tanh %139 : vector<1x128xf32>
    %141 = arith.negf %139 : vector<1x128xf32>
    %142 = math.exp %141 : vector<1x128xf32>
    %cst_35 = arith.constant 1.000000e+00 : f32
    %143 = vector.broadcast %cst_35 : f32 to vector<1x128xf32>
    %144 = arith.addf %143, %142 : vector<1x128xf32>
    %145 = arith.divf %143, %144 : vector<1x128xf32>
    %146 = arith.select %5, %140, %145 : vector<1x128xi1>, vector<1x128xf32>
    %147 = vector.extract_strided_slice %146 {offsets = [0, 0], sizes = [1, 32], strides = [1, 1]} : vector<1x128xf32> to vector<1x32xf32>
    %148 = vector.extract_strided_slice %146 {offsets = [0, 32], sizes = [1, 32], strides = [1, 1]} : vector<1x128xf32> to vector<1x32xf32>
    %149 = vector.extract_strided_slice %146 {offsets = [0, 64], sizes = [1, 32], strides = [1, 1]} : vector<1x128xf32> to vector<1x32xf32>
    %150 = vector.extract_strided_slice %146 {offsets = [0, 96], sizes = [1, 32], strides = [1, 1]} : vector<1x128xf32> to vector<1x32xf32>
    %151 = arith.mulf %148, %130 : vector<1x32xf32>
    %152 = arith.mulf %147, %149 : vector<1x32xf32>
    %153 = arith.addf %151, %152 : vector<1x32xf32>
    %154 = math.tanh %153 : vector<1x32xf32>
    %155 = arith.mulf %150, %154 : vector<1x32xf32>
    %156 = arith.truncf %155 : vector<1x32xf32> to vector<1x32xbf16>
    %cst_36 = arith.constant dense<0.000000e+00> : vector<1x128xf32>
    %157 = tpu.matmul %156, %7, %cst_36 {dimension_numbers = #tpu.dot_dimension_numbers<[1], [0], [0], [1], [0, 0, 1, 1], [], []>} : vector<1x32xbf16>, vector<32x128xbf16>, vector<1x128xf32> -> vector<1x128xf32>
    %158 = arith.addf %157, %10 : vector<1x128xf32>
    %159 = vector.extract_strided_slice %18 {offsets = [6, 0], sizes = [1, 128], strides = [1, 1]} : vector<8x128xf32> to vector<1x128xf32>
    %160 = arith.truncf %155 : vector<1x32xf32> to vector<1x32xbf16>
    %cst_37 = arith.constant dense<0.000000e+00> : vector<1x128xf32>
    %161 = tpu.matmul %160, %6, %cst_37 {dimension_numbers = #tpu.dot_dimension_numbers<[1], [0], [0], [1], [0, 0, 1, 1], [], []>} : vector<1x32xbf16>, vector<32x128xbf16>, vector<1x128xf32> -> vector<1x128xf32>
    %162 = arith.addf %159, %161 : vector<1x128xf32>
    %163 = math.tanh %162 : vector<1x128xf32>
    %164 = arith.negf %162 : vector<1x128xf32>
    %165 = math.exp %164 : vector<1x128xf32>
    %cst_38 = arith.constant 1.000000e+00 : f32
    %166 = vector.broadcast %cst_38 : f32 to vector<1x128xf32>
    %167 = arith.addf %166, %165 : vector<1x128xf32>
    %168 = arith.divf %166, %167 : vector<1x128xf32>
    %169 = arith.select %5, %163, %168 : vector<1x128xi1>, vector<1x128xf32>
    %170 = vector.extract_strided_slice %169 {offsets = [0, 0], sizes = [1, 32], strides = [1, 1]} : vector<1x128xf32> to vector<1x32xf32>
    %171 = vector.extract_strided_slice %169 {offsets = [0, 32], sizes = [1, 32], strides = [1, 1]} : vector<1x128xf32> to vector<1x32xf32>
    %172 = vector.extract_strided_slice %169 {offsets = [0, 64], sizes = [1, 32], strides = [1, 1]} : vector<1x128xf32> to vector<1x32xf32>
    %173 = vector.extract_strided_slice %169 {offsets = [0, 96], sizes = [1, 32], strides = [1, 1]} : vector<1x128xf32> to vector<1x32xf32>
    %174 = arith.mulf %171, %153 : vector<1x32xf32>
    %175 = arith.mulf %170, %172 : vector<1x32xf32>
    %176 = arith.addf %174, %175 : vector<1x32xf32>
    %177 = math.tanh %176 : vector<1x32xf32>
    %178 = arith.mulf %173, %177 : vector<1x32xf32>
    %179 = arith.truncf %178 : vector<1x32xf32> to vector<1x32xbf16>
    %cst_39 = arith.constant dense<0.000000e+00> : vector<1x128xf32>
    %180 = tpu.matmul %179, %7, %cst_39 {dimension_numbers = #tpu.dot_dimension_numbers<[1], [0], [0], [1], [0, 0, 1, 1], [], []>} : vector<1x32xbf16>, vector<32x128xbf16>, vector<1x128xf32> -> vector<1x128xf32>
    %181 = arith.addf %180, %10 : vector<1x128xf32>
    %182 = vector.extract_strided_slice %18 {offsets = [7, 0], sizes = [1, 128], strides = [1, 1]} : vector<8x128xf32> to vector<1x128xf32>
    %183 = arith.truncf %178 : vector<1x32xf32> to vector<1x32xbf16>
    %cst_40 = arith.constant dense<0.000000e+00> : vector<1x128xf32>
    %184 = tpu.matmul %183, %6, %cst_40 {dimension_numbers = #tpu.dot_dimension_numbers<[1], [0], [0], [1], [0, 0, 1, 1], [], []>} : vector<1x32xbf16>, vector<32x128xbf16>, vector<1x128xf32> -> vector<1x128xf32>
    %185 = arith.addf %182, %184 : vector<1x128xf32>
    %186 = math.tanh %185 : vector<1x128xf32>
    %187 = arith.negf %185 : vector<1x128xf32>
    %188 = math.exp %187 : vector<1x128xf32>
    %cst_41 = arith.constant 1.000000e+00 : f32
    %189 = vector.broadcast %cst_41 : f32 to vector<1x128xf32>
    %190 = arith.addf %189, %188 : vector<1x128xf32>
    %191 = arith.divf %189, %190 : vector<1x128xf32>
    %192 = arith.select %5, %186, %191 : vector<1x128xi1>, vector<1x128xf32>
    %193 = vector.extract_strided_slice %192 {offsets = [0, 0], sizes = [1, 32], strides = [1, 1]} : vector<1x128xf32> to vector<1x32xf32>
    %194 = vector.extract_strided_slice %192 {offsets = [0, 32], sizes = [1, 32], strides = [1, 1]} : vector<1x128xf32> to vector<1x32xf32>
    %195 = vector.extract_strided_slice %192 {offsets = [0, 64], sizes = [1, 32], strides = [1, 1]} : vector<1x128xf32> to vector<1x32xf32>
    %196 = vector.extract_strided_slice %192 {offsets = [0, 96], sizes = [1, 32], strides = [1, 1]} : vector<1x128xf32> to vector<1x32xf32>
    %197 = arith.mulf %194, %176 : vector<1x32xf32>
    %198 = arith.mulf %193, %195 : vector<1x32xf32>
    %199 = arith.addf %197, %198 : vector<1x32xf32>
    %200 = math.tanh %199 : vector<1x32xf32>
    %201 = arith.mulf %196, %200 : vector<1x32xf32>
    %202 = arith.truncf %201 : vector<1x32xf32> to vector<1x32xbf16>
    %cst_42 = arith.constant dense<0.000000e+00> : vector<1x128xf32>
    %203 = tpu.matmul %202, %7, %cst_42 {dimension_numbers = #tpu.dot_dimension_numbers<[1], [0], [0], [1], [0, 0, 1, 1], [], []>} : vector<1x32xbf16>, vector<32x128xbf16>, vector<1x128xf32> -> vector<1x128xf32>
    %204 = arith.addf %203, %10 : vector<1x128xf32>
    %205 = arith.truncf %201 : vector<1x32xf32> to vector<1x32xbf16>
    %cst_43 = arith.constant dense<0.000000e+00> : vector<1x128xf32>
    %206 = tpu.matmul %205, %8, %cst_43 {dimension_numbers = #tpu.dot_dimension_numbers<[1], [0], [0], [1], [0, 0, 1, 1], [], []>} : vector<1x32xbf16>, vector<32x128xbf16>, vector<1x128xf32> -> vector<1x128xf32>
    %207 = arith.addf %43, %206 : vector<1x128xf32>
    %208 = math.tanh %207 : vector<1x128xf32>
    %209 = arith.negf %207 : vector<1x128xf32>
    %210 = math.exp %209 : vector<1x128xf32>
    %cst_44 = arith.constant 1.000000e+00 : f32
    %211 = vector.broadcast %cst_44 : f32 to vector<1x128xf32>
    %212 = arith.addf %211, %210 : vector<1x128xf32>
    %213 = arith.divf %211, %212 : vector<1x128xf32>
    %214 = arith.select %5, %208, %213 : vector<1x128xi1>, vector<1x128xf32>
    %215 = vector.extract_strided_slice %214 {offsets = [0, 0], sizes = [1, 32], strides = [1, 1]} : vector<1x128xf32> to vector<1x32xf32>
    %216 = vector.extract_strided_slice %214 {offsets = [0, 32], sizes = [1, 32], strides = [1, 1]} : vector<1x128xf32> to vector<1x32xf32>
    %217 = vector.extract_strided_slice %214 {offsets = [0, 64], sizes = [1, 32], strides = [1, 1]} : vector<1x128xf32> to vector<1x32xf32>
    %218 = vector.extract_strided_slice %214 {offsets = [0, 96], sizes = [1, 32], strides = [1, 1]} : vector<1x128xf32> to vector<1x32xf32>
    %219 = arith.mulf %216, %199 : vector<1x32xf32>
    %220 = arith.mulf %215, %217 : vector<1x32xf32>
    %221 = arith.addf %219, %220 : vector<1x32xf32>
    %222 = math.tanh %221 : vector<1x32xf32>
    %223 = arith.mulf %218, %222 : vector<1x32xf32>
    %224 = arith.truncf %223 : vector<1x32xf32> to vector<1x32xbf16>
    %cst_45 = arith.constant dense<0.000000e+00> : vector<1x128xf32>
    %225 = tpu.matmul %224, %9, %cst_45 {dimension_numbers = #tpu.dot_dimension_numbers<[1], [0], [0], [1], [0, 0, 1, 1], [], []>} : vector<1x32xbf16>, vector<32x128xbf16>, vector<1x128xf32> -> vector<1x128xf32>
    %226 = arith.addf %225, %11 : vector<1x128xf32>
    %227 = arith.truncf %223 : vector<1x32xf32> to vector<1x32xbf16>
    %cst_46 = arith.constant dense<0.000000e+00> : vector<1x128xf32>
    %228 = tpu.matmul %227, %8, %cst_46 {dimension_numbers = #tpu.dot_dimension_numbers<[1], [0], [0], [1], [0, 0, 1, 1], [], []>} : vector<1x32xbf16>, vector<32x128xbf16>, vector<1x128xf32> -> vector<1x128xf32>
    %229 = arith.addf %66, %228 : vector<1x128xf32>
    %230 = math.tanh %229 : vector<1x128xf32>
    %231 = arith.negf %229 : vector<1x128xf32>
    %232 = math.exp %231 : vector<1x128xf32>
    %cst_47 = arith.constant 1.000000e+00 : f32
    %233 = vector.broadcast %cst_47 : f32 to vector<1x128xf32>
    %234 = arith.addf %233, %232 : vector<1x128xf32>
    %235 = arith.divf %233, %234 : vector<1x128xf32>
    %236 = arith.select %5, %230, %235 : vector<1x128xi1>, vector<1x128xf32>
    %237 = vector.extract_strided_slice %236 {offsets = [0, 0], sizes = [1, 32], strides = [1, 1]} : vector<1x128xf32> to vector<1x32xf32>
    %238 = vector.extract_strided_slice %236 {offsets = [0, 32], sizes = [1, 32], strides = [1, 1]} : vector<1x128xf32> to vector<1x32xf32>
    %239 = vector.extract_strided_slice %236 {offsets = [0, 64], sizes = [1, 32], strides = [1, 1]} : vector<1x128xf32> to vector<1x32xf32>
    %240 = vector.extract_strided_slice %236 {offsets = [0, 96], sizes = [1, 32], strides = [1, 1]} : vector<1x128xf32> to vector<1x32xf32>
    %241 = arith.mulf %238, %221 : vector<1x32xf32>
    %242 = arith.mulf %237, %239 : vector<1x32xf32>
    %243 = arith.addf %241, %242 : vector<1x32xf32>
    %244 = math.tanh %243 : vector<1x32xf32>
    %245 = arith.mulf %240, %244 : vector<1x32xf32>
    %246 = arith.truncf %245 : vector<1x32xf32> to vector<1x32xbf16>
    %cst_48 = arith.constant dense<0.000000e+00> : vector<1x128xf32>
    %247 = tpu.matmul %246, %9, %cst_48 {dimension_numbers = #tpu.dot_dimension_numbers<[1], [0], [0], [1], [0, 0, 1, 1], [], []>} : vector<1x32xbf16>, vector<32x128xbf16>, vector<1x128xf32> -> vector<1x128xf32>
    %248 = arith.addf %247, %11 : vector<1x128xf32>
    %249 = arith.truncf %245 : vector<1x32xf32> to vector<1x32xbf16>
    %cst_49 = arith.constant dense<0.000000e+00> : vector<1x128xf32>
    %250 = tpu.matmul %249, %8, %cst_49 {dimension_numbers = #tpu.dot_dimension_numbers<[1], [0], [0], [1], [0, 0, 1, 1], [], []>} : vector<1x32xbf16>, vector<32x128xbf16>, vector<1x128xf32> -> vector<1x128xf32>
    %251 = arith.addf %89, %250 : vector<1x128xf32>
    %252 = math.tanh %251 : vector<1x128xf32>
    %253 = arith.negf %251 : vector<1x128xf32>
    %254 = math.exp %253 : vector<1x128xf32>
    %cst_50 = arith.constant 1.000000e+00 : f32
    %255 = vector.broadcast %cst_50 : f32 to vector<1x128xf32>
    %256 = arith.addf %255, %254 : vector<1x128xf32>
    %257 = arith.divf %255, %256 : vector<1x128xf32>
    %258 = arith.select %5, %252, %257 : vector<1x128xi1>, vector<1x128xf32>
    %259 = vector.extract_strided_slice %258 {offsets = [0, 0], sizes = [1, 32], strides = [1, 1]} : vector<1x128xf32> to vector<1x32xf32>
    %260 = vector.extract_strided_slice %258 {offsets = [0, 32], sizes = [1, 32], strides = [1, 1]} : vector<1x128xf32> to vector<1x32xf32>
    %261 = vector.extract_strided_slice %258 {offsets = [0, 64], sizes = [1, 32], strides = [1, 1]} : vector<1x128xf32> to vector<1x32xf32>
    %262 = vector.extract_strided_slice %258 {offsets = [0, 96], sizes = [1, 32], strides = [1, 1]} : vector<1x128xf32> to vector<1x32xf32>
    %263 = arith.mulf %260, %243 : vector<1x32xf32>
    %264 = arith.mulf %259, %261 : vector<1x32xf32>
    %265 = arith.addf %263, %264 : vector<1x32xf32>
    %266 = math.tanh %265 : vector<1x32xf32>
    %267 = arith.mulf %262, %266 : vector<1x32xf32>
    %268 = arith.truncf %267 : vector<1x32xf32> to vector<1x32xbf16>
    %cst_51 = arith.constant dense<0.000000e+00> : vector<1x128xf32>
    %269 = tpu.matmul %268, %9, %cst_51 {dimension_numbers = #tpu.dot_dimension_numbers<[1], [0], [0], [1], [0, 0, 1, 1], [], []>} : vector<1x32xbf16>, vector<32x128xbf16>, vector<1x128xf32> -> vector<1x128xf32>
    %270 = arith.addf %269, %11 : vector<1x128xf32>
    %271 = arith.truncf %267 : vector<1x32xf32> to vector<1x32xbf16>
    %cst_52 = arith.constant dense<0.000000e+00> : vector<1x128xf32>
    %272 = tpu.matmul %271, %8, %cst_52 {dimension_numbers = #tpu.dot_dimension_numbers<[1], [0], [0], [1], [0, 0, 1, 1], [], []>} : vector<1x32xbf16>, vector<32x128xbf16>, vector<1x128xf32> -> vector<1x128xf32>
    %273 = arith.addf %112, %272 : vector<1x128xf32>
    %274 = math.tanh %273 : vector<1x128xf32>
    %275 = arith.negf %273 : vector<1x128xf32>
    %276 = math.exp %275 : vector<1x128xf32>
    %cst_53 = arith.constant 1.000000e+00 : f32
    %277 = vector.broadcast %cst_53 : f32 to vector<1x128xf32>
    %278 = arith.addf %277, %276 : vector<1x128xf32>
    %279 = arith.divf %277, %278 : vector<1x128xf32>
    %280 = arith.select %5, %274, %279 : vector<1x128xi1>, vector<1x128xf32>
    %281 = vector.extract_strided_slice %280 {offsets = [0, 0], sizes = [1, 32], strides = [1, 1]} : vector<1x128xf32> to vector<1x32xf32>
    %282 = vector.extract_strided_slice %280 {offsets = [0, 32], sizes = [1, 32], strides = [1, 1]} : vector<1x128xf32> to vector<1x32xf32>
    %283 = vector.extract_strided_slice %280 {offsets = [0, 64], sizes = [1, 32], strides = [1, 1]} : vector<1x128xf32> to vector<1x32xf32>
    %284 = vector.extract_strided_slice %280 {offsets = [0, 96], sizes = [1, 32], strides = [1, 1]} : vector<1x128xf32> to vector<1x32xf32>
    %285 = arith.mulf %282, %265 : vector<1x32xf32>
    %286 = arith.mulf %281, %283 : vector<1x32xf32>
    %287 = arith.addf %285, %286 : vector<1x32xf32>
    %288 = math.tanh %287 : vector<1x32xf32>
    %289 = arith.mulf %284, %288 : vector<1x32xf32>
    %290 = arith.truncf %289 : vector<1x32xf32> to vector<1x32xbf16>
    %cst_54 = arith.constant dense<0.000000e+00> : vector<1x128xf32>
    %291 = tpu.matmul %290, %9, %cst_54 {dimension_numbers = #tpu.dot_dimension_numbers<[1], [0], [0], [1], [0, 0, 1, 1], [], []>} : vector<1x32xbf16>, vector<32x128xbf16>, vector<1x128xf32> -> vector<1x128xf32>
    %292 = arith.addf %291, %11 : vector<1x128xf32>
    %293 = arith.truncf %289 : vector<1x32xf32> to vector<1x32xbf16>
    %cst_55 = arith.constant dense<0.000000e+00> : vector<1x128xf32>
    %294 = tpu.matmul %293, %8, %cst_55 {dimension_numbers = #tpu.dot_dimension_numbers<[1], [0], [0], [1], [0, 0, 1, 1], [], []>} : vector<1x32xbf16>, vector<32x128xbf16>, vector<1x128xf32> -> vector<1x128xf32>
    %295 = arith.addf %135, %294 : vector<1x128xf32>
    %296 = math.tanh %295 : vector<1x128xf32>
    %297 = arith.negf %295 : vector<1x128xf32>
    %298 = math.exp %297 : vector<1x128xf32>
    %cst_56 = arith.constant 1.000000e+00 : f32
    %299 = vector.broadcast %cst_56 : f32 to vector<1x128xf32>
    %300 = arith.addf %299, %298 : vector<1x128xf32>
    %301 = arith.divf %299, %300 : vector<1x128xf32>
    %302 = arith.select %5, %296, %301 : vector<1x128xi1>, vector<1x128xf32>
    %303 = vector.extract_strided_slice %302 {offsets = [0, 0], sizes = [1, 32], strides = [1, 1]} : vector<1x128xf32> to vector<1x32xf32>
    %304 = vector.extract_strided_slice %302 {offsets = [0, 32], sizes = [1, 32], strides = [1, 1]} : vector<1x128xf32> to vector<1x32xf32>
    %305 = vector.extract_strided_slice %302 {offsets = [0, 64], sizes = [1, 32], strides = [1, 1]} : vector<1x128xf32> to vector<1x32xf32>
    %306 = vector.extract_strided_slice %302 {offsets = [0, 96], sizes = [1, 32], strides = [1, 1]} : vector<1x128xf32> to vector<1x32xf32>
    %307 = arith.mulf %304, %287 : vector<1x32xf32>
    %308 = arith.mulf %303, %305 : vector<1x32xf32>
    %309 = arith.addf %307, %308 : vector<1x32xf32>
    %310 = math.tanh %309 : vector<1x32xf32>
    %311 = arith.mulf %306, %310 : vector<1x32xf32>
    %312 = arith.truncf %311 : vector<1x32xf32> to vector<1x32xbf16>
    %cst_57 = arith.constant dense<0.000000e+00> : vector<1x128xf32>
    %313 = tpu.matmul %312, %9, %cst_57 {dimension_numbers = #tpu.dot_dimension_numbers<[1], [0], [0], [1], [0, 0, 1, 1], [], []>} : vector<1x32xbf16>, vector<32x128xbf16>, vector<1x128xf32> -> vector<1x128xf32>
    %314 = arith.addf %313, %11 : vector<1x128xf32>
    %315 = arith.truncf %311 : vector<1x32xf32> to vector<1x32xbf16>
    %cst_58 = arith.constant dense<0.000000e+00> : vector<1x128xf32>
    %316 = tpu.matmul %315, %8, %cst_58 {dimension_numbers = #tpu.dot_dimension_numbers<[1], [0], [0], [1], [0, 0, 1, 1], [], []>} : vector<1x32xbf16>, vector<32x128xbf16>, vector<1x128xf32> -> vector<1x128xf32>
    %317 = arith.addf %158, %316 : vector<1x128xf32>
    %318 = math.tanh %317 : vector<1x128xf32>
    %319 = arith.negf %317 : vector<1x128xf32>
    %320 = math.exp %319 : vector<1x128xf32>
    %cst_59 = arith.constant 1.000000e+00 : f32
    %321 = vector.broadcast %cst_59 : f32 to vector<1x128xf32>
    %322 = arith.addf %321, %320 : vector<1x128xf32>
    %323 = arith.divf %321, %322 : vector<1x128xf32>
    %324 = arith.select %5, %318, %323 : vector<1x128xi1>, vector<1x128xf32>
    %325 = vector.extract_strided_slice %324 {offsets = [0, 0], sizes = [1, 32], strides = [1, 1]} : vector<1x128xf32> to vector<1x32xf32>
    %326 = vector.extract_strided_slice %324 {offsets = [0, 32], sizes = [1, 32], strides = [1, 1]} : vector<1x128xf32> to vector<1x32xf32>
    %327 = vector.extract_strided_slice %324 {offsets = [0, 64], sizes = [1, 32], strides = [1, 1]} : vector<1x128xf32> to vector<1x32xf32>
    %328 = vector.extract_strided_slice %324 {offsets = [0, 96], sizes = [1, 32], strides = [1, 1]} : vector<1x128xf32> to vector<1x32xf32>
    %329 = arith.mulf %326, %309 : vector<1x32xf32>
    %330 = arith.mulf %325, %327 : vector<1x32xf32>
    %331 = arith.addf %329, %330 : vector<1x32xf32>
    %332 = math.tanh %331 : vector<1x32xf32>
    %333 = arith.mulf %328, %332 : vector<1x32xf32>
    %334 = arith.truncf %333 : vector<1x32xf32> to vector<1x32xbf16>
    %cst_60 = arith.constant dense<0.000000e+00> : vector<1x128xf32>
    %335 = tpu.matmul %334, %9, %cst_60 {dimension_numbers = #tpu.dot_dimension_numbers<[1], [0], [0], [1], [0, 0, 1, 1], [], []>} : vector<1x32xbf16>, vector<32x128xbf16>, vector<1x128xf32> -> vector<1x128xf32>
    %336 = arith.addf %335, %11 : vector<1x128xf32>
    %337 = arith.truncf %333 : vector<1x32xf32> to vector<1x32xbf16>
    %cst_61 = arith.constant dense<0.000000e+00> : vector<1x128xf32>
    %338 = tpu.matmul %337, %8, %cst_61 {dimension_numbers = #tpu.dot_dimension_numbers<[1], [0], [0], [1], [0, 0, 1, 1], [], []>} : vector<1x32xbf16>, vector<32x128xbf16>, vector<1x128xf32> -> vector<1x128xf32>
    %339 = arith.addf %181, %338 : vector<1x128xf32>
    %340 = math.tanh %339 : vector<1x128xf32>
    %341 = arith.negf %339 : vector<1x128xf32>
    %342 = math.exp %341 : vector<1x128xf32>
    %cst_62 = arith.constant 1.000000e+00 : f32
    %343 = vector.broadcast %cst_62 : f32 to vector<1x128xf32>
    %344 = arith.addf %343, %342 : vector<1x128xf32>
    %345 = arith.divf %343, %344 : vector<1x128xf32>
    %346 = arith.select %5, %340, %345 : vector<1x128xi1>, vector<1x128xf32>
    %347 = vector.extract_strided_slice %346 {offsets = [0, 0], sizes = [1, 32], strides = [1, 1]} : vector<1x128xf32> to vector<1x32xf32>
    %348 = vector.extract_strided_slice %346 {offsets = [0, 32], sizes = [1, 32], strides = [1, 1]} : vector<1x128xf32> to vector<1x32xf32>
    %349 = vector.extract_strided_slice %346 {offsets = [0, 64], sizes = [1, 32], strides = [1, 1]} : vector<1x128xf32> to vector<1x32xf32>
    %350 = vector.extract_strided_slice %346 {offsets = [0, 96], sizes = [1, 32], strides = [1, 1]} : vector<1x128xf32> to vector<1x32xf32>
    %351 = arith.mulf %348, %331 : vector<1x32xf32>
    %352 = arith.mulf %347, %349 : vector<1x32xf32>
    %353 = arith.addf %351, %352 : vector<1x32xf32>
    %354 = math.tanh %353 : vector<1x32xf32>
    %355 = arith.mulf %350, %354 : vector<1x32xf32>
    %356 = arith.truncf %355 : vector<1x32xf32> to vector<1x32xbf16>
    %cst_63 = arith.constant dense<0.000000e+00> : vector<1x128xf32>
    %357 = tpu.matmul %356, %9, %cst_63 {dimension_numbers = #tpu.dot_dimension_numbers<[1], [0], [0], [1], [0, 0, 1, 1], [], []>} : vector<1x32xbf16>, vector<32x128xbf16>, vector<1x128xf32> -> vector<1x128xf32>
    %358 = arith.addf %357, %11 : vector<1x128xf32>
    %359 = arith.truncf %355 : vector<1x32xf32> to vector<1x32xbf16>
    %cst_64 = arith.constant dense<0.000000e+00> : vector<1x128xf32>
    %360 = tpu.matmul %359, %8, %cst_64 {dimension_numbers = #tpu.dot_dimension_numbers<[1], [0], [0], [1], [0, 0, 1, 1], [], []>} : vector<1x32xbf16>, vector<32x128xbf16>, vector<1x128xf32> -> vector<1x128xf32>
    %361 = arith.addf %204, %360 : vector<1x128xf32>
    %362 = math.tanh %361 : vector<1x128xf32>
    %363 = arith.negf %361 : vector<1x128xf32>
    %364 = math.exp %363 : vector<1x128xf32>
    %cst_65 = arith.constant 1.000000e+00 : f32
    %365 = vector.broadcast %cst_65 : f32 to vector<1x128xf32>
    %366 = arith.addf %365, %364 : vector<1x128xf32>
    %367 = arith.divf %365, %366 : vector<1x128xf32>
    %368 = arith.select %5, %362, %367 : vector<1x128xi1>, vector<1x128xf32>
    %369 = vector.extract_strided_slice %368 {offsets = [0, 0], sizes = [1, 32], strides = [1, 1]} : vector<1x128xf32> to vector<1x32xf32>
    %370 = vector.extract_strided_slice %368 {offsets = [0, 32], sizes = [1, 32], strides = [1, 1]} : vector<1x128xf32> to vector<1x32xf32>
    %371 = vector.extract_strided_slice %368 {offsets = [0, 64], sizes = [1, 32], strides = [1, 1]} : vector<1x128xf32> to vector<1x32xf32>
    %372 = vector.extract_strided_slice %368 {offsets = [0, 96], sizes = [1, 32], strides = [1, 1]} : vector<1x128xf32> to vector<1x32xf32>
    %373 = arith.mulf %370, %353 : vector<1x32xf32>
    %374 = arith.mulf %369, %371 : vector<1x32xf32>
    %375 = arith.addf %373, %374 : vector<1x32xf32>
    %376 = math.tanh %375 : vector<1x32xf32>
    %377 = arith.mulf %372, %376 : vector<1x32xf32>
    %378 = arith.truncf %377 : vector<1x32xf32> to vector<1x32xbf16>
    %cst_66 = arith.constant dense<0.000000e+00> : vector<1x128xf32>
    %379 = tpu.matmul %378, %9, %cst_66 {dimension_numbers = #tpu.dot_dimension_numbers<[1], [0], [0], [1], [0, 0, 1, 1], [], []>} : vector<1x32xbf16>, vector<32x128xbf16>, vector<1x128xf32> -> vector<1x128xf32>
    %380 = arith.addf %379, %11 : vector<1x128xf32>
    %381 = tpu.concatenate %226, %248, %270, %292, %314, %336, %358, %380 in 0 : vector<1x128xf32>, vector<1x128xf32>, vector<1x128xf32>, vector<1x128xf32>, vector<1x128xf32>, vector<1x128xf32>, vector<1x128xf32>, vector<1x128xf32> -> vector<8x128xf32>
    %c0_67 = arith.constant 0 : index
    %c0_68 = arith.constant 0 : index
    %382 = vector.load %arg9[%c0_67, %c0_68] : memref<8x128xf32, #tpu.memory_space<vmem>>, vector<8x128xf32>
    tpu.vector_store %arg9[%c0_67, %c0_68], %381 {strides = array<i32>} : memref<8x128xf32, #tpu.memory_space<vmem>>, vector<8x128xf32>,
    return
  }
}

</mosaic_0001>

<llo_original>
// kernel: tpu_custom_call.1
$region0: #{tpu_custom_call.1}
  #allocation0 [shape = 'u32[]', space=smem, size = 0x4, offset = 0x4, fixed_abs, tag = 'smem constant byte address 0x4 - core index']
  #allocation1 [shape = 'u32[144,128]{1,0:T(1,128)}', space=vmem, size = 0x12000, scoped, tag = 'internal scratch']
  %s0 = inlined_call_operand.hbm [shape: f32[8,8], index: 0, kind: input, shape index: {}]
  %s1 = inlined_call_operand.hbm [shape: bf16[8,128], index: 1, kind: input, shape index: {}]
  %s2 = inlined_call_operand.hbm [shape: bf16[32,128], index: 2, kind: input, shape index: {}]
  %s3 = inlined_call_operand.vmem [shape: f32[1,128], index: 3, kind: input, shape index: {}]
  %s4 = inlined_call_operand.hbm [shape: bf16[32,128], index: 4, kind: input, shape index: {}]
  %s5 = inlined_call_operand.vmem [shape: bf16[32,128], index: 5, kind: input, shape index: {}]
  %s6 = inlined_call_operand.vmem [shape: f32[1,128], index: 6, kind: input, shape index: {}]
  %s7 = inlined_call_operand.hbm [shape: bf16[32,128], index: 7, kind: input, shape index: {}]
  %s8 = inlined_call_operand.vmem [shape: f32[1,128], index: 8, kind: input, shape index: {}]
  %s9 = inlined_call_operand.hbm [shape: f32[8,128], index: 9, kind: output, shape index: {}]
  %s10 = sld [smem:[#allocation0]]
  $region66: #{tpu_custom_call.1} parent=0
    _
  %s12 = ssub.s32 1, %s10
  %s13 = scalar_select 0, %s12, %s10
  $region1: #{tpu_custom_call.1} parent=0
    #allocation2 [shape = 'u8[4096]{0}', space=vmem, size = 0x1000, scoped, tag = 'input window, operand 0, single buffered']
    #allocation3 [shape = 's32[1]{0}', space=sflag, size = 0x4, scoped, tag = 'scoped memory for tpu_custom_call.1']
    #allocation4 [shape = 's32[1]{0}', space=sflag, size = 0x4, scoped, tag = 'scoped memory for tpu_custom_call.1']
    #allocation5 [shape = 'u8[2048]{0}', space=vmem, size = 0x800, scoped, tag = 'input window, operand 1, single buffered']
    #allocation6 [shape = 's32[1]{0}', space=sflag, size = 0x4, scoped, tag = 'scoped memory for tpu_custom_call.1']
    #allocation7 [shape = 'u8[8192]{0}', space=vmem, size = 0x2000, scoped, tag = 'input window, operand 2, single buffered']
    #allocation8 [shape = 'u8[8192]{0}', space=vmem, size = 0x2000, scoped, tag = 'input window, operand 4, single buffered']
    #allocation9 [shape = 's32[1]{0}', space=sflag, size = 0x4, scoped, tag = 'scoped memory for tpu_custom_call.1']
    #allocation10 [shape = 'u8[8192]{0}', space=vmem, size = 0x2000, scoped, tag = 'input window, operand 7, single buffered']
    #allocation11 [shape = 'u8[4096]{0}', space=vmem, size = 0x1000, scoped, tag = 'output window, operand 0, single buffered']
    %14 = vsyncpa [#allocation3], 0
    %15 = vsyncpa [#allocation6], 0
    %16 = vsyncpa [#allocation9], 0
    %17 = vsyncpa [#allocation4], 0
    // Predicated region
    $region2: #{tpu_custom_call.1} parent=1 // pred_check
      _
    $region3: #{tpu_custom_call.1} parent=1 // pred_check_branch
      %19 = sbr.rel (0) target = $region5
    $region4: #{tpu_custom_call.1} parent=1 // pred_region
      %s21 = ssub.s32 128, 128
      %22 = vsyncadd [#allocation3], %s21
      %s24 = sshll.u32 [#allocation2], 4
      %s25 = int_to_ptr.vmem [resolvable:$true] %s24
      %27 = dma.hbm_to_vmem [thread:$0]  %s0, 128, %s25, [#allocation3]
    $region5: #{tpu_custom_call.1} parent=1 // pred_fallthru
      _
    // Predicated region
    $region6: #{tpu_custom_call.1} parent=1 // pred_check
      _
    $region7: #{tpu_custom_call.1} parent=1 // pred_check_branch
      %29 = sbr.rel (0) target = $region9
    $region8: #{tpu_custom_call.1} parent=1 // pred_region
      %s31 = ssub.s32 64, 64
      %32 = vsyncadd [#allocation6], %s31
      %s34 = sshll.u32 [#allocation5], 4
      %s35 = int_to_ptr.vmem [resolvable:$true] %s34
      %37 = dma.hbm_to_vmem [thread:$0]  %s1, 64, %s35, [#allocation6]
    $region9: #{tpu_custom_call.1} parent=1 // pred_fallthru
      _
    // Predicated region
    $region10: #{tpu_custom_call.1} parent=1 // pred_check
      _
    $region11: #{tpu_custom_call.1} parent=1 // pred_check_branch
      %39 = sbr.rel (0) target = $region13
    $region12: #{tpu_custom_call.1} parent=1 // pred_region
      %s41 = ssub.s32 256, 256
      %42 = vsyncadd [#allocation6], %s41
      %s43 = sshll.u32 [#allocation7], 4
      %s44 = int_to_ptr.vmem [resolvable:$true] %s43
      %49 = dma.hbm_to_vmem [thread:$0]  %s2, 256, %s44, [#allocation6], 64, 64, 4
    $region13: #{tpu_custom_call.1} parent=1 // pred_fallthru
      _
    // Predicated region
    $region14: #{tpu_custom_call.1} parent=1 // pred_check
      _
    $region15: #{tpu_custom_call.1} parent=1 // pred_check_branch
      %51 = sbr.rel (0) target = $region17
    $region16: #{tpu_custom_call.1} parent=1 // pred_region
      _
    $region17: #{tpu_custom_call.1} parent=1 // pred_fallthru
      _
    // Predicated region
    $region18: #{tpu_custom_call.1} parent=1 // pred_check
      _
    $region19: #{tpu_custom_call.1} parent=1 // pred_check_branch
      %53 = sbr.rel (0) target = $region21
    $region20: #{tpu_custom_call.1} parent=1 // pred_region
      %s55 = ssub.s32 256, 256
      %56 = vsyncadd [#allocation9], %s55
      %s57 = sshll.u32 [#allocation8], 4
      %s58 = int_to_ptr.vmem [resolvable:$true] %s57
      %63 = dma.hbm_to_vmem [thread:$0]  %s4, 256, %s58, [#allocation9], 64, 64, 4
    $region21: #{tpu_custom_call.1} parent=1 // pred_fallthru
      _
    // Predicated region
    $region22: #{tpu_custom_call.1} parent=1 // pred_check
      _
    $region23: #{tpu_custom_call.1} parent=1 // pred_check_branch
      %65 = sbr.rel (0) target = $region25
    $region24: #{tpu_custom_call.1} parent=1 // pred_region
      _
    $region25: #{tpu_custom_call.1} parent=1 // pred_fallthru
      _
    // Predicated region
    $region26: #{tpu_custom_call.1} parent=1 // pred_check
      _
    $region27: #{tpu_custom_call.1} parent=1 // pred_check_branch
      %67 = sbr.rel (0) target = $region29
    $region28: #{tpu_custom_call.1} parent=1 // pred_region
      _
    $region29: #{tpu_custom_call.1} parent=1 // pred_fallthru
      _
    // Predicated region
    $region30: #{tpu_custom_call.1} parent=1 // pred_check
      _
    $region31: #{tpu_custom_call.1} parent=1 // pred_check_branch
      %69 = sbr.rel (0) target = $region33
    $region32: #{tpu_custom_call.1} parent=1 // pred_region
      %s71 = ssub.s32 256, 256
      %72 = vsyncadd [#allocation9], %s71
      %s73 = sshll.u32 [#allocation10], 4
      %s74 = int_to_ptr.vmem [resolvable:$true] %s73
      %79 = dma.hbm_to_vmem [thread:$0]  %s7, 256, %s74, [#allocation9], 64, 64, 4
    $region33: #{tpu_custom_call.1} parent=1 // pred_fallthru
      _
    // Predicated region
    $region34: #{tpu_custom_call.1} parent=1 // pred_check
      _
    $region35: #{tpu_custom_call.1} parent=1 // pred_check_branch
      %81 = sbr.rel (0) target = $region37
    $region36: #{tpu_custom_call.1} parent=1 // pred_region
      _
    $region37: #{tpu_custom_call.1} parent=1 // pred_fallthru
      _
    // Predicated region
    $region38: #{tpu_custom_call.1} parent=1 // pred_check
      _
    $region39: #{tpu_custom_call.1} parent=1 // pred_check_branch
      %83 = sbr.rel (0) target = $region41
    $region40: #{tpu_custom_call.1} parent=1 // pred_region
      %84 = dma.done [#allocation3], 128
    $region41: #{tpu_custom_call.1} parent=1 // pred_fallthru
      _
    // Predicated region
    $region42: #{tpu_custom_call.1} parent=1 // pred_check
      _
    $region43: #{tpu_custom_call.1} parent=1 // pred_check_branch
      %86 = sbr.rel (0) target = $region45
    $region44: #{tpu_custom_call.1} parent=1 // pred_region
      %87 = dma.done [#allocation6], 64
    $region45: #{tpu_custom_call.1} parent=1 // pred_fallthru
      _
    // Predicated region
    $region46: #{tpu_custom_call.1} parent=1 // pred_check
      _
    $region47: #{tpu_custom_call.1} parent=1 // pred_check_branch
      %89 = sbr.rel (0) target = $region49
    $region48: #{tpu_custom_call.1} parent=1 // pred_region
      %90 = dma.done [#allocation6], 256
    $region49: #{tpu_custom_call.1} parent=1 // pred_fallthru
      _
    // Predicated region
    $region50: #{tpu_custom_call.1} parent=1 // pred_check
      _
    $region51: #{tpu_custom_call.1} parent=1 // pred_check_branch
      %92 = sbr.rel (0) target = $region53
    $region52: #{tpu_custom_call.1} parent=1 // pred_region
      %93 = dma.done [#allocation9], 256
    $region53: #{tpu_custom_call.1} parent=1 // pred_fallthru
      _
    // Predicated region
    $region54: #{tpu_custom_call.1} parent=1 // pred_check
      _
    $region55: #{tpu_custom_call.1} parent=1 // pred_check_branch
      %95 = sbr.rel (0) target = $region57
    $region56: #{tpu_custom_call.1} parent=1 // pred_region
      %96 = dma.done [#allocation9], 256
    $region57: #{tpu_custom_call.1} parent=1 // pred_fallthru
      _
    %v98 = vlaneseq
    %v99 = vand.u32 %v98, 127
    %vm100 = vcmp.ge.s32.totalorder %v99, 64
    %vm101 = vcmp.lt.s32.totalorder %v99, 96
    %vm102 = vmand %vm100, %vm101
    %v103 = vld [vmem:[#allocation7] sm:$0xf]
    %v104 = vld [vmem:[#allocation7 + $0x4] sm:$0xf]
    %v105 = vld [vmem:[#allocation7 + $0x8] sm:$0xf]
    %v106 = vld [vmem:[#allocation7 + $0xc] sm:$0xf]
    %v107 = vld [vmem:[#allocation8] sm:$0xf]
    %v108 = vld [vmem:[#allocation8 + $0x4] sm:$0xf]
    %v109 = vld [vmem:[#allocation8 + $0x8] sm:$0xf]
    %v110 = vld [vmem:[#allocation8 + $0xc] sm:$0xf]
    %v111 = vld [vmem:[%s5] sm:$0xf]
    %v112 = vld [vmem:[%s5 + $0x4] sm:$0xf]
    %v113 = vld [vmem:[%s5 + $0x8] sm:$0xf]
    %v114 = vld [vmem:[%s5 + $0xc] sm:$0xf]
    %v115 = vld [vmem:[#allocation10] sm:$0xf]
    %v116 = vld [vmem:[#allocation10 + $0x4] sm:$0xf]
    %v117 = vld [vmem:[#allocation10 + $0x8] sm:$0xf]
    %v118 = vld [vmem:[#allocation10 + $0xc] sm:$0xf]
    %v119 = vld [vmem:[%s6] sm:$0x1]
    %v120 = vld [vmem:[%s8] sm:$0x1]
    %v121 = vld [vmem:[#allocation2] sm:$0xff]
    %v122 = vpack.c.bf16 %v121, %v121
    %v123 = vld [vmem:[#allocation5] sm:$0xf]
    %v124 = vld [vmem:[%s3] sm:$0x1]
    %v126 = vlaneseq
    %v127 = vshrl.u32 %v126, 7
    %v128 = vsub.s32 0, %v127
    %v129 = vrot.slane %v124, %v128
    %vm131 = vcmask 64512
    %v133 = vsel %vm131, %v122, 0
    %vm135 = vcmask 1043456
    %v137 = vsel %vm135, %v123, 0
    %139 = vmatprep.subr.bf16.mxu0 0
    %140 = vmatpush1.bf16.msra.mxu0 %v137
    %141 = vmatprep.subr.bf16.mxu0 0
    %142 = vmatpush1.bf16.msra.mxu0 0
    %143 = vmatprep.subr.bf16.mxu0 0
    %144 = vmatpush1.bf16.msra.mxu0 0
    %145 = vmatprep.subr.bf16.mxu0 0
    %146 = vmatpush1.bf16.msra.mxu0 0
    %147 = vmatprep.subr.bf16.mxu0 0
    %148 = vmatpush1.bf16.msra.mxu0 0
    %149 = vmatprep.subr.bf16.mxu0 0
    %150 = vmatpush1.bf16.msra.mxu0 0
    %151 = vmatprep.subr.bf16.mxu0 0
    %152 = vmatpush1.bf16.msra.mxu0 0
    %153 = vmatprep.subr.bf16.mxu0 0
    %154 = vmatpush1.bf16.msra.mxu0 0
    %155 = vmatprep.subr.bf16.mxu0 0
    %156 = vmatpush1.bf16.msra.mxu0 0
    %157 = vmatprep.subr.bf16.mxu0 0
    %158 = vmatpush1.bf16.msra.mxu0 0
    %159 = vmatprep.subr.bf16.mxu0 0
    %160 = vmatpush1.bf16.msra.mxu0 0
    %161 = vmatprep.subr.bf16.mxu0 0
    %162 = vmatpush1.bf16.msra.mxu0 0
    %163 = vmatprep.subr.bf16.mxu0 0
    %164 = vmatpush1.bf16.msra.mxu0 0
    %165 = vmatprep.subr.bf16.mxu0 0
    %166 = vmatpush1.bf16.msra.mxu0 0
    %167 = vmatprep.subr.bf16.mxu0 0
    %168 = vmatpush1.bf16.msra.mxu0 0
    %169 = vmatprep.subr.bf16.mxu0 0
    %170 = vmatpush1.bf16.msra.mxu0 0
    %171 = vmatprep.mubr.bf16.mxu0 0
    %172 = vmatmul.mubr.bf16.gmra.mrb[0].mxu0 %v133
    %v173 = vpop.f32.mrb[0].mxu0
    %v174 = vadd.f32 %v129, %v173
    %v175 = vpop.f32.mrb[0].mxu0
    %v176 = vpop.f32.mrb[0].mxu0
    %v177 = vpop.f32.mrb[0].mxu0
    %178 = vdwg.mxu0
    %v183 = vunpack.c.l.b16 %v103
    %v184 = vunpack.c.l.b16 %v104
    %v185 = vunpack.c.l.b16 %v105
    %v186 = vunpack.c.l.b16 %v106
    %v187 = vpack.c.b16 %v184, %v183
    %v188 = vpack.c.b16 %v186, %v185
    %vm191 = vcmask 261120
    %v193 = vsel %vm191, 0, 0
    %195 = vmatprep.subr.bf16.mxu0 0
    %196 = vmatpush1.bf16.msra.mxu0 %v187
    %197 = vmatprep.subr.bf16.mxu0 0
    %198 = vmatpush1.bf16.msra.mxu0 %v188
    %199 = vmatprep.subr.bf16.mxu0 0
    %200 = vmatpush1.bf16.msra.mxu0 0
    %201 = vmatprep.subr.bf16.mxu0 0
    %202 = vmatpush1.bf16.msra.mxu0 0
    %203 = vmatprep.subr.bf16.mxu0 0
    %204 = vmatpush1.bf16.msra.mxu0 0
    %205 = vmatprep.subr.bf16.mxu0 0
    %206 = vmatpush1.bf16.msra.mxu0 0
    %207 = vmatprep.subr.bf16.mxu0 0
    %208 = vmatpush1.bf16.msra.mxu0 0
    %209 = vmatprep.subr.bf16.mxu0 0
    %210 = vmatpush1.bf16.msra.mxu0 0
    %211 = vmatprep.subr.bf16.mxu0 0
    %212 = vmatpush1.bf16.msra.mxu0 0
    %213 = vmatprep.subr.bf16.mxu0 0
    %214 = vmatpush1.bf16.msra.mxu0 0
    %215 = vmatprep.subr.bf16.mxu0 0
    %216 = vmatpush1.bf16.msra.mxu0 0
    %217 = vmatprep.subr.bf16.mxu0 0
    %218 = vmatpush1.bf16.msra.mxu0 0
    %219 = vmatprep.subr.bf16.mxu0 0
    %220 = vmatpush1.bf16.msra.mxu0 0
    %221 = vmatprep.subr.bf16.mxu0 0
    %222 = vmatpush1.bf16.msra.mxu0 0
    %223 = vmatprep.subr.bf16.mxu0 0
    %224 = vmatpush1.bf16.msra.mxu0 0
    %225 = vmatprep.subr.bf16.mxu0 0
    %226 = vmatpush1.bf16.msra.mxu0 0
    %227 = vmatprep.mubr.bf16.mxu0 0
    %228 = vmatmul.mubr.bf16.gmra.mrb[0].mxu0 %v193
    %v229 = vpop.f32.mrb[0].mxu0
    %v230 = vadd.f32 0.0, %v229
    %v231 = vpop.f32.mrb[0].mxu0
    %v232 = vpop.f32.mrb[0].mxu0
    %v233 = vpop.f32.mrb[0].mxu0
    %234 = vdwg.mxu0
    %v235 = vadd.f32 %v174, %v230
    %v236 = vtanh.pop %v235
    %v237 = vxor.u32 %v235, 2147483648
    %v238 = vmul.f32 %v237, 1.442695
    %v239 = vpow.pop %v238
    %v240 = vadd.f32 %v239, 1.0
    %v241 = vrcp.pop %v240
    %v242 = vmul.f32 1.0, %v241
    %v243 = vsel %vm102, %v236, %v242
    %v244 = vmul.f32 %v243, 0.0
    %246 = vrot.lane.b32.xlu0 %v243, 64
    %v247 = vpop.permute.xlu0 %246
    %v249 = vmul.f32 %v243, %v247
    %251 = vrot.lane.b32.xlu0 %v249, 32
    %v252 = vpop.permute.xlu0 %251
    %v254 = vadd.f32 %v244, %v252
    %v255 = vtanh.pop %v254
    %257 = vrot.lane.b32.xlu0 %v255, 64
    %v258 = vpop.permute.xlu0 %257
    %v260 = vmul.f32 %v243, %v258
    %v261 = vpack.c.bf16 %v260, %v260
    %263 = vrot.lane.b32.xlu0 %v261, 32
    %v264 = vpop.permute.xlu0 %263
    %v269 = vunpack.c.l.b16 %v107
    %v270 = vunpack.c.l.b16 %v108
    %v271 = vunpack.c.l.b16 %v109
    %v272 = vunpack.c.l.b16 %v110
    %v273 = vpack.c.b16 %v270, %v269
    %v274 = vpack.c.b16 %v272, %v271
    %v278 = vsel %vm191, %v264, 0
    %280 = vmatprep.subr.bf16.mxu0 0
    %281 = vmatpush1.bf16.msra.mxu0 %v273
    %282 = vmatprep.subr.bf16.mxu0 0
    %283 = vmatpush1.bf16.msra.mxu0 %v274
    %284 = vmatprep.subr.bf16.mxu0 0
    %285 = vmatpush1.bf16.msra.mxu0 0
    %286 = vmatprep.subr.bf16.mxu0 0
    %287 = vmatpush1.bf16.msra.mxu0 0
    %288 = vmatprep.subr.bf16.mxu0 0
    %289 = vmatpush1.bf16.msra.mxu0 0
    %290 = vmatprep.subr.bf16.mxu0 0
    %291 = vmatpush1.bf16.msra.mxu0 0
    %292 = vmatprep.subr.bf16.mxu0 0
    %293 = vmatpush1.bf16.msra.mxu0 0
    %294 = vmatprep.subr.bf16.mxu0 0
    %295 = vmatpush1.bf16.msra.mxu0 0
    %296 = vmatprep.subr.bf16.mxu0 0
    %297 = vmatpush1.bf16.msra.mxu0 0
    %298 = vmatprep.subr.bf16.mxu0 0
    %299 = vmatpush1.bf16.msra.mxu0 0
    %300 = vmatprep.subr.bf16.mxu0 0
    %301 = vmatpush1.bf16.msra.mxu0 0
    %302 = vmatprep.subr.bf16.mxu0 0
    %303 = vmatpush1.bf16.msra.mxu0 0
    %304 = vmatprep.subr.bf16.mxu0 0
    %305 = vmatpush1.bf16.msra.mxu0 0
    %306 = vmatprep.subr.bf16.mxu0 0
    %307 = vmatpush1.bf16.msra.mxu0 0
    %308 = vmatprep.subr.bf16.mxu0 0
    %309 = vmatpush1.bf16.msra.mxu0 0
    %310 = vmatprep.subr.bf16.mxu0 0
    %311 = vmatpush1.bf16.msra.mxu0 0
    %312 = vmatprep.mubr.bf16.mxu0 0
    %313 = vmatmul.mubr.bf16.gmra.mrb[0].mxu0 %v278
    %v314 = vpop.f32.mrb[0].mxu0
    %v315 = vadd.f32 %v119, %v314
    %v316 = vpop.f32.mrb[0].mxu0
    %v317 = vpop.f32.mrb[0].mxu0
    %v318 = vpop.f32.mrb[0].mxu0
    %319 = vdwg.mxu0
    %320 = vmatprep.subr.bf16.mxu0 0
    %321 = vmatpush1.bf16.msra.mxu0 %v187
    %322 = vmatprep.subr.bf16.mxu0 0
    %323 = vmatpush1.bf16.msra.mxu0 %v188
    %324 = vmatprep.subr.bf16.mxu0 0
    %325 = vmatpush1.bf16.msra.mxu0 0
    %326 = vmatprep.subr.bf16.mxu0 0
    %327 = vmatpush1.bf16.msra.mxu0 0
    %328 = vmatprep.subr.bf16.mxu0 0
    %329 = vmatpush1.bf16.msra.mxu0 0
    %330 = vmatprep.subr.bf16.mxu0 0
    %331 = vmatpush1.bf16.msra.mxu0 0
    %332 = vmatprep.subr.bf16.mxu0 0
    %333 = vmatpush1.bf16.msra.mxu0 0
    %334 = vmatprep.subr.bf16.mxu0 0
    %335 = vmatpush1.bf16.msra.mxu0 0
    %336 = vmatprep.subr.bf16.mxu0 0
    %337 = vmatpush1.bf16.msra.mxu0 0
    %338 = vmatprep.subr.bf16.mxu0 0
    %339 = vmatpush1.bf16.msra.mxu0 0
    %340 = vmatprep.subr.bf16.mxu0 0
    %341 = vmatpush1.bf16.msra.mxu0 0
    %342 = vmatprep.subr.bf16.mxu0 0
    %343 = vmatpush1.bf16.msra.mxu0 0
    %344 = vmatprep.subr.bf16.mxu0 0
    %345 = vmatpush1.bf16.msra.mxu0 0
    %346 = vmatprep.subr.bf16.mxu0 0
    %347 = vmatpush1.bf16.msra.mxu0 0
    %348 = vmatprep.subr.bf16.mxu0 0
    %349 = vmatpush1.bf16.msra.mxu0 0
    %350 = vmatprep.subr.bf16.mxu0 0
    %351 = vmatpush1.bf16.msra.mxu0 0
    %352 = vmatprep.mubr.bf16.mxu0 0
    %353 = vmatmul.mubr.bf16.gmra.mrb[0].mxu0 %v278
    %v354 = vpop.f32.mrb[0].mxu0
    %v355 = vadd.f32 0.0, %v354
    %v356 = vpop.f32.mrb[0].mxu0
    %v357 = vpop.f32.mrb[0].mxu0
    %v358 = vpop.f32.mrb[0].mxu0
    %359 = vdwg.mxu0
    %v361 = vrot.slane %v355, 7
    %v363 = vadd.f32 %v174, %v361
    %v364 = vtanh.pop %v363
    %v365 = vxor.u32 %v363, 2147483648
    %v366 = vmul.f32 %v365, 1.442695
    %v367 = vpow.pop %v366
    %v368 = vadd.f32 %v367, 1.0
    %v369 = vrcp.pop %v368
    %v370 = vmul.f32 1.0, %v369
    %v371 = vsel %vm102, %v364, %v370
    %v373 = vrot.slane %v254, 7
    %v375 = vmul.f32 %v371, %v373
    %377 = vrot.lane.b32.xlu0 %v371, 64
    %v378 = vpop.permute.xlu0 %377
    %v380 = vmul.f32 %v371, %v378
    %382 = vrot.lane.b32.xlu0 %v380, 32
    %v383 = vpop.permute.xlu0 %382
    %v385 = vadd.f32 %v375, %v383
    %v386 = vtanh.pop %v385
    %388 = vrot.lane.b32.xlu0 %v386, 64
    %v389 = vpop.permute.xlu0 %388
    %v391 = vmul.f32 %v371, %v389
    %v392 = vpack.c.bf16 %v391, %v391
    %v394 = vshrl.u32 %v392, 16
    %396 = vrot.lane.b32.xlu0 %v394, 32
    %v397 = vpop.permute.xlu0 %396
    %v399 = vsel %vm191, %v397, 0
    %401 = vmatprep.subr.bf16.mxu0 0
    %402 = vmatpush1.bf16.msra.mxu0 %v273
    %403 = vmatprep.subr.bf16.mxu0 0
    %404 = vmatpush1.bf16.msra.mxu0 %v274
    %405 = vmatprep.subr.bf16.mxu0 0
    %406 = vmatpush1.bf16.msra.mxu0 0
    %407 = vmatprep.subr.bf16.mxu0 0
    %408 = vmatpush1.bf16.msra.mxu0 0
    %409 = vmatprep.subr.bf16.mxu0 0
    %410 = vmatpush1.bf16.msra.mxu0 0
    %411 = vmatprep.subr.bf16.mxu0 0
    %412 = vmatpush1.bf16.msra.mxu0 0
    %413 = vmatprep.subr.bf16.mxu0 0
    %414 = vmatpush1.bf16.msra.mxu0 0
    %415 = vmatprep.subr.bf16.mxu0 0
    %416 = vmatpush1.bf16.msra.mxu0 0
    %417 = vmatprep.subr.bf16.mxu0 0
    %418 = vmatpush1.bf16.msra.mxu0 0
    %419 = vmatprep.subr.bf16.mxu0 0
    %420 = vmatpush1.bf16.msra.mxu0 0
    %421 = vmatprep.subr.bf16.mxu0 0
    %422 = vmatpush1.bf16.msra.mxu0 0
    %423 = vmatprep.subr.bf16.mxu0 0
    %424 = vmatpush1.bf16.msra.mxu0 0
    %425 = vmatprep.subr.bf16.mxu0 0
    %426 = vmatpush1.bf16.msra.mxu0 0
    %427 = vmatprep.subr.bf16.mxu0 0
    %428 = vmatpush1.bf16.msra.mxu0 0
    %429 = vmatprep.subr.bf16.mxu0 0
    %430 = vmatpush1.bf16.msra.mxu0 0
    %431 = vmatprep.subr.bf16.mxu0 0
    %432 = vmatpush1.bf16.msra.mxu0 0
    %433 = vmatprep.mubr.bf16.mxu0 0
    %434 = vmatmul.mubr.bf16.gmra.mrb[0].mxu0 %v399
    %v435 = vpop.f32.mrb[0].mxu0
    %v436 = vadd.f32 %v119, %v435
    %v437 = vpop.f32.mrb[0].mxu0
    %v438 = vpop.f32.mrb[0].mxu0
    %v439 = vpop.f32.mrb[0].mxu0
    %440 = vdwg.mxu0
    %441 = vmatprep.subr.bf16.mxu0 0
    %442 = vmatpush1.bf16.msra.mxu0 %v187
    %443 = vmatprep.subr.bf16.mxu0 0
    %444 = vmatpush1.bf16.msra.mxu0 %v188
    %445 = vmatprep.subr.bf16.mxu0 0
    %446 = vmatpush1.bf16.msra.mxu0 0
    %447 = vmatprep.subr.bf16.mxu0 0
    %448 = vmatpush1.bf16.msra.mxu0 0
    %449 = vmatprep.subr.bf16.mxu0 0
    %450 = vmatpush1.bf16.msra.mxu0 0
    %451 = vmatprep.subr.bf16.mxu0 0
    %452 = vmatpush1.bf16.msra.mxu0 0
    %453 = vmatprep.subr.bf16.mxu0 0
    %454 = vmatpush1.bf16.msra.mxu0 0
    %455 = vmatprep.subr.bf16.mxu0 0
    %456 = vmatpush1.bf16.msra.mxu0 0
    %457 = vmatprep.subr.bf16.mxu0 0
    %458 = vmatpush1.bf16.msra.mxu0 0
    %459 = vmatprep.subr.bf16.mxu0 0
    %460 = vmatpush1.bf16.msra.mxu0 0
    %461 = vmatprep.subr.bf16.mxu0 0
    %462 = vmatpush1.bf16.msra.mxu0 0
    %463 = vmatprep.subr.bf16.mxu0 0
    %464 = vmatpush1.bf16.msra.mxu0 0
    %465 = vmatprep.subr.bf16.mxu0 0
    %466 = vmatpush1.bf16.msra.mxu0 0
    %467 = vmatprep.subr.bf16.mxu0 0
    %468 = vmatpush1.bf16.msra.mxu0 0
    %469 = vmatprep.subr.bf16.mxu0 0
    %470 = vmatpush1.bf16.msra.mxu0 0
    %471 = vmatprep.subr.bf16.mxu0 0
    %472 = vmatpush1.bf16.msra.mxu0 0
    %473 = vmatprep.mubr.bf16.mxu0 0
    %474 = vmatmul.mubr.bf16.gmra.mrb[0].mxu0 %v399
    %v475 = vpop.f32.mrb[0].mxu0
    %v476 = vadd.f32 0.0, %v475
    %v477 = vpop.f32.mrb[0].mxu0
    %v478 = vpop.f32.mrb[0].mxu0
    %v479 = vpop.f32.mrb[0].mxu0
    %480 = vdwg.mxu0
    %v482 = vrot.slane %v476, 6
    %v484 = vadd.f32 %v174, %v482
    %v485 = vtanh.pop %v484
    %v486 = vxor.u32 %v484, 2147483648
    %v487 = vmul.f32 %v486, 1.442695
    %v488 = vpow.pop %v487
    %v489 = vadd.f32 %v488, 1.0
    %v490 = vrcp.pop %v489
    %v491 = vmul.f32 1.0, %v490
    %v492 = vsel %vm102, %v485, %v491
    %v494 = vrot.slane %v385, 7
    %v496 = vmul.f32 %v492, %v494
    %498 = vrot.lane.b32.xlu0 %v492, 64
    %v499 = vpop.permute.xlu0 %498
    %v501 = vmul.f32 %v492, %v499
    %503 = vrot.lane.b32.xlu0 %v501, 32
    %v504 = vpop.permute.xlu0 %503
    %v506 = vadd.f32 %v496, %v504
    %v507 = vtanh.pop %v506
    %509 = vrot.lane.b32.xlu0 %v507, 64
    %v510 = vpop.permute.xlu0 %509
    %v512 = vmul.f32 %v492, %v510
    %v513 = vpack.c.bf16 %v512, %v512
    %v515 = vrot.slane %v513, 1
    %516 = vrot.lane.b32.xlu0 %v515, 32
    %v517 = vpop.permute.xlu0 %516
    %v519 = vsel %vm191, %v517, 0
    %521 = vmatprep.subr.bf16.mxu0 0
    %522 = vmatpush1.bf16.msra.mxu0 %v273
    %523 = vmatprep.subr.bf16.mxu0 0
    %524 = vmatpush1.bf16.msra.mxu0 %v274
    %525 = vmatprep.subr.bf16.mxu0 0
    %526 = vmatpush1.bf16.msra.mxu0 0
    %527 = vmatprep.subr.bf16.mxu0 0
    %528 = vmatpush1.bf16.msra.mxu0 0
    %529 = vmatprep.subr.bf16.mxu0 0
    %530 = vmatpush1.bf16.msra.mxu0 0
    %531 = vmatprep.subr.bf16.mxu0 0
    %532 = vmatpush1.bf16.msra.mxu0 0
    %533 = vmatprep.subr.bf16.mxu0 0
    %534 = vmatpush1.bf16.msra.mxu0 0
    %535 = vmatprep.subr.bf16.mxu0 0
    %536 = vmatpush1.bf16.msra.mxu0 0
    %537 = vmatprep.subr.bf16.mxu0 0
    %538 = vmatpush1.bf16.msra.mxu0 0
    %539 = vmatprep.subr.bf16.mxu0 0
    %540 = vmatpush1.bf16.msra.mxu0 0
    %541 = vmatprep.subr.bf16.mxu0 0
    %542 = vmatpush1.bf16.msra.mxu0 0
    %543 = vmatprep.subr.bf16.mxu0 0
    %544 = vmatpush1.bf16.msra.mxu0 0
    %545 = vmatprep.subr.bf16.mxu0 0
    %546 = vmatpush1.bf16.msra.mxu0 0
    %547 = vmatprep.subr.bf16.mxu0 0
    %548 = vmatpush1.bf16.msra.mxu0 0
    %549 = vmatprep.subr.bf16.mxu0 0
    %550 = vmatpush1.bf16.msra.mxu0 0
    %551 = vmatprep.subr.bf16.mxu0 0
    %552 = vmatpush1.bf16.msra.mxu0 0
    %553 = vmatprep.mubr.bf16.mxu0 0
    %554 = vmatmul.mubr.bf16.gmra.mrb[0].mxu0 %v519
    %v555 = vpop.f32.mrb[0].mxu0
    %v556 = vadd.f32 %v119, %v555
    %v557 = vpop.f32.mrb[0].mxu0
    %v558 = vpop.f32.mrb[0].mxu0
    %v559 = vpop.f32.mrb[0].mxu0
    %560 = vdwg.mxu0
    %561 = vmatprep.subr.bf16.mxu0 0
    %562 = vmatpush1.bf16.msra.mxu0 %v187
    %563 = vmatprep.subr.bf16.mxu0 0
    %564 = vmatpush1.bf16.msra.mxu0 %v188
    %565 = vmatprep.subr.bf16.mxu0 0
    %566 = vmatpush1.bf16.msra.mxu0 0
    %567 = vmatprep.subr.bf16.mxu0 0
    %568 = vmatpush1.bf16.msra.mxu0 0
    %569 = vmatprep.subr.bf16.mxu0 0
    %570 = vmatpush1.bf16.msra.mxu0 0
    %571 = vmatprep.subr.bf16.mxu0 0
    %572 = vmatpush1.bf16.msra.mxu0 0
    %573 = vmatprep.subr.bf16.mxu0 0
    %574 = vmatpush1.bf16.msra.mxu0 0
    %575 = vmatprep.subr.bf16.mxu0 0
    %576 = vmatpush1.bf16.msra.mxu0 0
    %577 = vmatprep.subr.bf16.mxu0 0
    %578 = vmatpush1.bf16.msra.mxu0 0
    %579 = vmatprep.subr.bf16.mxu0 0
    %580 = vmatpush1.bf16.msra.mxu0 0
    %581 = vmatprep.subr.bf16.mxu0 0
    %582 = vmatpush1.bf16.msra.mxu0 0
    %583 = vmatprep.subr.bf16.mxu0 0
    %584 = vmatpush1.bf16.msra.mxu0 0
    %585 = vmatprep.subr.bf16.mxu0 0
    %586 = vmatpush1.bf16.msra.mxu0 0
    %587 = vmatprep.subr.bf16.mxu0 0
    %588 = vmatpush1.bf16.msra.mxu0 0
    %589 = vmatprep.subr.bf16.mxu0 0
    %590 = vmatpush1.bf16.msra.mxu0 0
    %591 = vmatprep.subr.bf16.mxu0 0
    %592 = vmatpush1.bf16.msra.mxu0 0
    %593 = vmatprep.mubr.bf16.mxu0 0
    %594 = vmatmul.mubr.bf16.gmra.mrb[0].mxu0 %v519
    %v595 = vpop.f32.mrb[0].mxu0
    %v596 = vadd.f32 0.0, %v595
    %v597 = vpop.f32.mrb[0].mxu0
    %v598 = vpop.f32.mrb[0].mxu0
    %v599 = vpop.f32.mrb[0].mxu0
    %600 = vdwg.mxu0
    %v602 = vrot.slane %v596, 5
    %v604 = vadd.f32 %v174, %v602
    %v605 = vtanh.pop %v604
    %v606 = vxor.u32 %v604, 2147483648
    %v607 = vmul.f32 %v606, 1.442695
    %v608 = vpow.pop %v607
    %v609 = vadd.f32 %v608, 1.0
    %v610 = vrcp.pop %v609
    %v611 = vmul.f32 1.0, %v610
    %v612 = vsel %vm102, %v605, %v611
    %v614 = vrot.slane %v506, 7
    %v616 = vmul.f32 %v612, %v614
    %618 = vrot.lane.b32.xlu0 %v612, 64
    %v619 = vpop.permute.xlu0 %618
    %v621 = vmul.f32 %v612, %v619
    %623 = vrot.lane.b32.xlu0 %v621, 32
    %v624 = vpop.permute.xlu0 %623
    %v626 = vadd.f32 %v616, %v624
    %v627 = vtanh.pop %v626
    %629 = vrot.lane.b32.xlu0 %v627, 64
    %v630 = vpop.permute.xlu0 %629
    %v632 = vmul.f32 %v612, %v630
    %v633 = vpack.c.bf16 %v632, %v632
    %v635 = vshrl.u32 %v633, 16
    %v637 = vrot.slane %v635, 1
    %638 = vrot.lane.b32.xlu0 %v637, 32
    %v639 = vpop.permute.xlu0 %638
    %v641 = vsel %vm191, %v639, 0
    %643 = vmatprep.subr.bf16.mxu0 0
    %644 = vmatpush1.bf16.msra.mxu0 %v273
    %645 = vmatprep.subr.bf16.mxu0 0
    %646 = vmatpush1.bf16.msra.mxu0 %v274
    %647 = vmatprep.subr.bf16.mxu0 0
    %648 = vmatpush1.bf16.msra.mxu0 0
    %649 = vmatprep.subr.bf16.mxu0 0
    %650 = vmatpush1.bf16.msra.mxu0 0
    %651 = vmatprep.subr.bf16.mxu0 0
    %652 = vmatpush1.bf16.msra.mxu0 0
    %653 = vmatprep.subr.bf16.mxu0 0
    %654 = vmatpush1.bf16.msra.mxu0 0
    %655 = vmatprep.subr.bf16.mxu0 0
    %656 = vmatpush1.bf16.msra.mxu0 0
    %657 = vmatprep.subr.bf16.mxu0 0
    %658 = vmatpush1.bf16.msra.mxu0 0
    %659 = vmatprep.subr.bf16.mxu0 0
    %660 = vmatpush1.bf16.msra.mxu0 0
    %661 = vmatprep.subr.bf16.mxu0 0
    %662 = vmatpush1.bf16.msra.mxu0 0
    %663 = vmatprep.subr.bf16.mxu0 0
    %664 = vmatpush1.bf16.msra.mxu0 0
    %665 = vmatprep.subr.bf16.mxu0 0
    %666 = vmatpush1.bf16.msra.mxu0 0
    %667 = vmatprep.subr.bf16.mxu0 0
    %668 = vmatpush1.bf16.msra.mxu0 0
    %669 = vmatprep.subr.bf16.mxu0 0
    %670 = vmatpush1.bf16.msra.mxu0 0
    %671 = vmatprep.subr.bf16.mxu0 0
    %672 = vmatpush1.bf16.msra.mxu0 0
    %673 = vmatprep.subr.bf16.mxu0 0
    %674 = vmatpush1.bf16.msra.mxu0 0
    %675 = vmatprep.mubr.bf16.mxu0 0
    %676 = vmatmul.mubr.bf16.gmra.mrb[0].mxu0 %v641
    %v677 = vpop.f32.mrb[0].mxu0
    %v678 = vadd.f32 %v119, %v677
    %v679 = vpop.f32.mrb[0].mxu0
    %v680 = vpop.f32.mrb[0].mxu0
    %v681 = vpop.f32.mrb[0].mxu0
    %682 = vdwg.mxu0
    %683 = vmatprep.subr.bf16.mxu0 0
    %684 = vmatpush1.bf16.msra.mxu0 %v187
    %685 = vmatprep.subr.bf16.mxu0 0
    %686 = vmatpush1.bf16.msra.mxu0 %v188
    %687 = vmatprep.subr.bf16.mxu0 0
    %688 = vmatpush1.bf16.msra.mxu0 0
    %689 = vmatprep.subr.bf16.mxu0 0
    %690 = vmatpush1.bf16.msra.mxu0 0
    %691 = vmatprep.subr.bf16.mxu0 0
    %692 = vmatpush1.bf16.msra.mxu0 0
    %693 = vmatprep.subr.bf16.mxu0 0
    %694 = vmatpush1.bf16.msra.mxu0 0
    %695 = vmatprep.subr.bf16.mxu0 0
    %696 = vmatpush1.bf16.msra.mxu0 0
    %697 = vmatprep.subr.bf16.mxu0 0
    %698 = vmatpush1.bf16.msra.mxu0 0
    %699 = vmatprep.subr.bf16.mxu0 0
    %700 = vmatpush1.bf16.msra.mxu0 0
    %701 = vmatprep.subr.bf16.mxu0 0
    %702 = vmatpush1.bf16.msra.mxu0 0
    %703 = vmatprep.subr.bf16.mxu0 0
    %704 = vmatpush1.bf16.msra.mxu0 0
    %705 = vmatprep.subr.bf16.mxu0 0
    %706 = vmatpush1.bf16.msra.mxu0 0
    %707 = vmatprep.subr.bf16.mxu0 0
    %708 = vmatpush1.bf16.msra.mxu0 0
    %709 = vmatprep.subr.bf16.mxu0 0
    %710 = vmatpush1.bf16.msra.mxu0 0
    %711 = vmatprep.subr.bf16.mxu0 0
    %712 = vmatpush1.bf16.msra.mxu0 0
    %713 = vmatprep.subr.bf16.mxu0 0
    %714 = vmatpush1.bf16.msra.mxu0 0
    %715 = vmatprep.mubr.bf16.mxu0 0
    %716 = vmatmul.mubr.bf16.gmra.mrb[0].mxu0 %v641
    %v717 = vpop.f32.mrb[0].mxu0
    %v718 = vadd.f32 0.0, %v717
    %v719 = vpop.f32.mrb[0].mxu0
    %v720 = vpop.f32.mrb[0].mxu0
    %v721 = vpop.f32.mrb[0].mxu0
    %722 = vdwg.mxu0
    %v724 = vrot.slane %v718, 4
    %v726 = vadd.f32 %v174, %v724
    %v727 = vtanh.pop %v726
    %v728 = vxor.u32 %v726, 2147483648
    %v729 = vmul.f32 %v728, 1.442695
    %v730 = vpow.pop %v729
    %v731 = vadd.f32 %v730, 1.0
    %v732 = vrcp.pop %v731
    %v733 = vmul.f32 1.0, %v732
    %v734 = vsel %vm102, %v727, %v733
    %v736 = vrot.slane %v626, 7
    %v738 = vmul.f32 %v734, %v736
    %740 = vrot.lane.b32.xlu0 %v734, 64
    %v741 = vpop.permute.xlu0 %740
    %v743 = vmul.f32 %v734, %v741
    %745 = vrot.lane.b32.xlu0 %v743, 32
    %v746 = vpop.permute.xlu0 %745
    %v748 = vadd.f32 %v738, %v746
    %v749 = vtanh.pop %v748
    %751 = vrot.lane.b32.xlu0 %v749, 64
    %v752 = vpop.permute.xlu0 %751
    %v754 = vmul.f32 %v734, %v752
    %v755 = vpack.c.bf16 %v754, %v754
    %v757 = vrot.slane %v755, 2
    %758 = vrot.lane.b32.xlu0 %v757, 32
    %v759 = vpop.permute.xlu0 %758
    %v761 = vsel %vm191, %v759, 0
    %763 = vmatprep.subr.bf16.mxu0 0
    %764 = vmatpush1.bf16.msra.mxu0 %v273
    %765 = vmatprep.subr.bf16.mxu0 0
    %766 = vmatpush1.bf16.msra.mxu0 %v274
    %767 = vmatprep.subr.bf16.mxu0 0
    %768 = vmatpush1.bf16.msra.mxu0 0
    %769 = vmatprep.subr.bf16.mxu0 0
    %770 = vmatpush1.bf16.msra.mxu0 0
    %771 = vmatprep.subr.bf16.mxu0 0
    %772 = vmatpush1.bf16.msra.mxu0 0
    %773 = vmatprep.subr.bf16.mxu0 0
    %774 = vmatpush1.bf16.msra.mxu0 0
    %775 = vmatprep.subr.bf16.mxu0 0
    %776 = vmatpush1.bf16.msra.mxu0 0
    %777 = vmatprep.subr.bf16.mxu0 0
    %778 = vmatpush1.bf16.msra.mxu0 0
    %779 = vmatprep.subr.bf16.mxu0 0
    %780 = vmatpush1.bf16.msra.mxu0 0
    %781 = vmatprep.subr.bf16.mxu0 0
    %782 = vmatpush1.bf16.msra.mxu0 0
    %783 = vmatprep.subr.bf16.mxu0 0
    %784 = vmatpush1.bf16.msra.mxu0 0
    %785 = vmatprep.subr.bf16.mxu0 0
    %786 = vmatpush1.bf16.msra.mxu0 0
    %787 = vmatprep.subr.bf16.mxu0 0
    %788 = vmatpush1.bf16.msra.mxu0 0
    %789 = vmatprep.subr.bf16.mxu0 0
    %790 = vmatpush1.bf16.msra.mxu0 0
    %791 = vmatprep.subr.bf16.mxu0 0
    %792 = vmatpush1.bf16.msra.mxu0 0
    %793 = vmatprep.subr.bf16.mxu0 0
    %794 = vmatpush1.bf16.msra.mxu0 0
    %795 = vmatprep.mubr.bf16.mxu0 0
    %796 = vmatmul.mubr.bf16.gmra.mrb[0].mxu0 %v761
    %v797 = vpop.f32.mrb[0].mxu0
    %v798 = vadd.f32 %v119, %v797
    %v799 = vpop.f32.mrb[0].mxu0
    %v800 = vpop.f32.mrb[0].mxu0
    %v801 = vpop.f32.mrb[0].mxu0
    %802 = vdwg.mxu0
    %803 = vmatprep.subr.bf16.mxu0 0
    %804 = vmatpush1.bf16.msra.mxu0 %v187
    %805 = vmatprep.subr.bf16.mxu0 0
    %806 = vmatpush1.bf16.msra.mxu0 %v188
    %807 = vmatprep.subr.bf16.mxu0 0
    %808 = vmatpush1.bf16.msra.mxu0 0
    %809 = vmatprep.subr.bf16.mxu0 0
    %810 = vmatpush1.bf16.msra.mxu0 0
    %811 = vmatprep.subr.bf16.mxu0 0
    %812 = vmatpush1.bf16.msra.mxu0 0
    %813 = vmatprep.subr.bf16.mxu0 0
    %814 = vmatpush1.bf16.msra.mxu0 0
    %815 = vmatprep.subr.bf16.mxu0 0
    %816 = vmatpush1.bf16.msra.mxu0 0
    %817 = vmatprep.subr.bf16.mxu0 0
    %818 = vmatpush1.bf16.msra.mxu0 0
    %819 = vmatprep.subr.bf16.mxu0 0
    %820 = vmatpush1.bf16.msra.mxu0 0
    %821 = vmatprep.subr.bf16.mxu0 0
    %822 = vmatpush1.bf16.msra.mxu0 0
    %823 = vmatprep.subr.bf16.mxu0 0
    %824 = vmatpush1.bf16.msra.mxu0 0
    %825 = vmatprep.subr.bf16.mxu0 0
    %826 = vmatpush1.bf16.msra.mxu0 0
    %827 = vmatprep.subr.bf16.mxu0 0
    %828 = vmatpush1.bf16.msra.mxu0 0
    %829 = vmatprep.subr.bf16.mxu0 0
    %830 = vmatpush1.bf16.msra.mxu0 0
    %831 = vmatprep.subr.bf16.mxu0 0
    %832 = vmatpush1.bf16.msra.mxu0 0
    %833 = vmatprep.subr.bf16.mxu0 0
    %834 = vmatpush1.bf16.msra.mxu0 0
    %835 = vmatprep.mubr.bf16.mxu0 0
    %836 = vmatmul.mubr.bf16.gmra.mrb[0].mxu0 %v761
    %v837 = vpop.f32.mrb[0].mxu0
    %v838 = vadd.f32 0.0, %v837
    %v839 = vpop.f32.mrb[0].mxu0
    %v840 = vpop.f32.mrb[0].mxu0
    %v841 = vpop.f32.mrb[0].mxu0
    %842 = vdwg.mxu0
    %v844 = vrot.slane %v838, 3
    %v846 = vadd.f32 %v174, %v844
    %v847 = vtanh.pop %v846
    %v848 = vxor.u32 %v846, 2147483648
    %v849 = vmul.f32 %v848, 1.442695
    %v850 = vpow.pop %v849
    %v851 = vadd.f32 %v850, 1.0
    %v852 = vrcp.pop %v851
    %v853 = vmul.f32 1.0, %v852
    %v854 = vsel %vm102, %v847, %v853
    %v856 = vrot.slane %v748, 7
    %v858 = vmul.f32 %v854, %v856
    %860 = vrot.lane.b32.xlu0 %v854, 64
    %v861 = vpop.permute.xlu0 %860
    %v863 = vmul.f32 %v854, %v861
    %865 = vrot.lane.b32.xlu0 %v863, 32
    %v866 = vpop.permute.xlu0 %865
    %v868 = vadd.f32 %v858, %v866
    %v869 = vtanh.pop %v868
    %871 = vrot.lane.b32.xlu0 %v869, 64
    %v872 = vpop.permute.xlu0 %871
    %v874 = vmul.f32 %v854, %v872
    %v875 = vpack.c.bf16 %v874, %v874
    %v877 = vshrl.u32 %v875, 16
    %v879 = vrot.slane %v877, 2
    %880 = vrot.lane.b32.xlu0 %v879, 32
    %v881 = vpop.permute.xlu0 %880
    %v883 = vsel %vm191, %v881, 0
    %885 = vmatprep.subr.bf16.mxu0 0
    %886 = vmatpush1.bf16.msra.mxu0 %v273
    %887 = vmatprep.subr.bf16.mxu0 0
    %888 = vmatpush1.bf16.msra.mxu0 %v274
    %889 = vmatprep.subr.bf16.mxu0 0
    %890 = vmatpush1.bf16.msra.mxu0 0
    %891 = vmatprep.subr.bf16.mxu0 0
    %892 = vmatpush1.bf16.msra.mxu0 0
    %893 = vmatprep.subr.bf16.mxu0 0
    %894 = vmatpush1.bf16.msra.mxu0 0
    %895 = vmatprep.subr.bf16.mxu0 0
    %896 = vmatpush1.bf16.msra.mxu0 0
    %897 = vmatprep.subr.bf16.mxu0 0
    %898 = vmatpush1.bf16.msra.mxu0 0
    %899 = vmatprep.subr.bf16.mxu0 0
    %900 = vmatpush1.bf16.msra.mxu0 0
    %901 = vmatprep.subr.bf16.mxu0 0
    %902 = vmatpush1.bf16.msra.mxu0 0
    %903 = vmatprep.subr.bf16.mxu0 0
    %904 = vmatpush1.bf16.msra.mxu0 0
    %905 = vmatprep.subr.bf16.mxu0 0
    %906 = vmatpush1.bf16.msra.mxu0 0
    %907 = vmatprep.subr.bf16.mxu0 0
    %908 = vmatpush1.bf16.msra.mxu0 0
    %909 = vmatprep.subr.bf16.mxu0 0
    %910 = vmatpush1.bf16.msra.mxu0 0
    %911 = vmatprep.subr.bf16.mxu0 0
    %912 = vmatpush1.bf16.msra.mxu0 0
    %913 = vmatprep.subr.bf16.mxu0 0
    %914 = vmatpush1.bf16.msra.mxu0 0
    %915 = vmatprep.subr.bf16.mxu0 0
    %916 = vmatpush1.bf16.msra.mxu0 0
    %917 = vmatprep.mubr.bf16.mxu0 0
    %918 = vmatmul.mubr.bf16.gmra.mrb[0].mxu0 %v883
    %v919 = vpop.f32.mrb[0].mxu0
    %v920 = vadd.f32 %v119, %v919
    %v921 = vpop.f32.mrb[0].mxu0
    %v922 = vpop.f32.mrb[0].mxu0
    %v923 = vpop.f32.mrb[0].mxu0
    %924 = vdwg.mxu0
    %925 = vmatprep.subr.bf16.mxu0 0
    %926 = vmatpush1.bf16.msra.mxu0 %v187
    %927 = vmatprep.subr.bf16.mxu0 0
    %928 = vmatpush1.bf16.msra.mxu0 %v188
    %929 = vmatprep.subr.bf16.mxu0 0
    %930 = vmatpush1.bf16.msra.mxu0 0
    %931 = vmatprep.subr.bf16.mxu0 0
    %932 = vmatpush1.bf16.msra.mxu0 0
    %933 = vmatprep.subr.bf16.mxu0 0
    %934 = vmatpush1.bf16.msra.mxu0 0
    %935 = vmatprep.subr.bf16.mxu0 0
    %936 = vmatpush1.bf16.msra.mxu0 0
    %937 = vmatprep.subr.bf16.mxu0 0
    %938 = vmatpush1.bf16.msra.mxu0 0
    %939 = vmatprep.subr.bf16.mxu0 0
    %940 = vmatpush1.bf16.msra.mxu0 0
    %941 = vmatprep.subr.bf16.mxu0 0
    %942 = vmatpush1.bf16.msra.mxu0 0
    %943 = vmatprep.subr.bf16.mxu0 0
    %944 = vmatpush1.bf16.msra.mxu0 0
    %945 = vmatprep.subr.bf16.mxu0 0
    %946 = vmatpush1.bf16.msra.mxu0 0
    %947 = vmatprep.subr.bf16.mxu0 0
    %948 = vmatpush1.bf16.msra.mxu0 0
    %949 = vmatprep.subr.bf16.mxu0 0
    %950 = vmatpush1.bf16.msra.mxu0 0
    %951 = vmatprep.subr.bf16.mxu0 0
    %952 = vmatpush1.bf16.msra.mxu0 0
    %953 = vmatprep.subr.bf16.mxu0 0
    %954 = vmatpush1.bf16.msra.mxu0 0
    %955 = vmatprep.subr.bf16.mxu0 0
    %956 = vmatpush1.bf16.msra.mxu0 0
    %957 = vmatprep.mubr.bf16.mxu0 0
    %958 = vmatmul.mubr.bf16.gmra.mrb[0].mxu0 %v883
    %v959 = vpop.f32.mrb[0].mxu0
    %v960 = vadd.f32 0.0, %v959
    %v961 = vpop.f32.mrb[0].mxu0
    %v962 = vpop.f32.mrb[0].mxu0
    %v963 = vpop.f32.mrb[0].mxu0
    %964 = vdwg.mxu0
    %v966 = vrot.slane %v960, 2
    %v968 = vadd.f32 %v174, %v966
    %v969 = vtanh.pop %v968
    %v970 = vxor.u32 %v968, 2147483648
    %v971 = vmul.f32 %v970, 1.442695
    %v972 = vpow.pop %v971
    %v973 = vadd.f32 %v972, 1.0
    %v974 = vrcp.pop %v973
    %v975 = vmul.f32 1.0, %v974
    %v976 = vsel %vm102, %v969, %v975
    %v978 = vrot.slane %v868, 7
    %v980 = vmul.f32 %v976, %v978
    %982 = vrot.lane.b32.xlu0 %v976, 64
    %v983 = vpop.permute.xlu0 %982
    %v985 = vmul.f32 %v976, %v983
    %987 = vrot.lane.b32.xlu0 %v985, 32
    %v988 = vpop.permute.xlu0 %987
    %v990 = vadd.f32 %v980, %v988
    %v991 = vtanh.pop %v990
    %993 = vrot.lane.b32.xlu0 %v991, 64
    %v994 = vpop.permute.xlu0 %993
    %v996 = vmul.f32 %v976, %v994
    %v997 = vpack.c.bf16 %v996, %v996
    %v999 = vrot.slane %v997, 3
    %1000 = vrot.lane.b32.xlu0 %v999, 32
    %v1001 = vpop.permute.xlu0 %1000
    %v1003 = vsel %vm191, %v1001, 0
    %1005 = vmatprep.subr.bf16.mxu0 0
    %1006 = vmatpush1.bf16.msra.mxu0 %v273
    %1007 = vmatprep.subr.bf16.mxu0 0
    %1008 = vmatpush1.bf16.msra.mxu0 %v274
    %1009 = vmatprep.subr.bf16.mxu0 0
    %1010 = vmatpush1.bf16.msra.mxu0 0
    %1011 = vmatprep.subr.bf16.mxu0 0
    %1012 = vmatpush1.bf16.msra.mxu0 0
    %1013 = vmatprep.subr.bf16.mxu0 0
    %1014 = vmatpush1.bf16.msra.mxu0 0
    %1015 = vmatprep.subr.bf16.mxu0 0
    %1016 = vmatpush1.bf16.msra.mxu0 0
    %1017 = vmatprep.subr.bf16.mxu0 0
    %1018 = vmatpush1.bf16.msra.mxu0 0
    %1019 = vmatprep.subr.bf16.mxu0 0
    %1020 = vmatpush1.bf16.msra.mxu0 0
    %1021 = vmatprep.subr.bf16.mxu0 0
    %1022 = vmatpush1.bf16.msra.mxu0 0
    %1023 = vmatprep.subr.bf16.mxu0 0
    %1024 = vmatpush1.bf16.msra.mxu0 0
    %1025 = vmatprep.subr.bf16.mxu0 0
    %1026 = vmatpush1.bf16.msra.mxu0 0
    %1027 = vmatprep.subr.bf16.mxu0 0
    %1028 = vmatpush1.bf16.msra.mxu0 0
    %1029 = vmatprep.subr.bf16.mxu0 0
    %1030 = vmatpush1.bf16.msra.mxu0 0
    %1031 = vmatprep.subr.bf16.mxu0 0
    %1032 = vmatpush1.bf16.msra.mxu0 0
    %1033 = vmatprep.subr.bf16.mxu0 0
    %1034 = vmatpush1.bf16.msra.mxu0 0
    %1035 = vmatprep.subr.bf16.mxu0 0
    %1036 = vmatpush1.bf16.msra.mxu0 0
    %1037 = vmatprep.mubr.bf16.mxu0 0
    %1038 = vmatmul.mubr.bf16.gmra.mrb[0].mxu0 %v1003
    %v1039 = vpop.f32.mrb[0].mxu0
    %v1040 = vadd.f32 %v119, %v1039
    %v1041 = vpop.f32.mrb[0].mxu0
    %v1042 = vpop.f32.mrb[0].mxu0
    %v1043 = vpop.f32.mrb[0].mxu0
    %1044 = vdwg.mxu0
    %1045 = vmatprep.subr.bf16.mxu0 0
    %1046 = vmatpush1.bf16.msra.mxu0 %v187
    %1047 = vmatprep.subr.bf16.mxu0 0
    %1048 = vmatpush1.bf16.msra.mxu0 %v188
    %1049 = vmatprep.subr.bf16.mxu0 0
    %1050 = vmatpush1.bf16.msra.mxu0 0
    %1051 = vmatprep.subr.bf16.mxu0 0
    %1052 = vmatpush1.bf16.msra.mxu0 0
    %1053 = vmatprep.subr.bf16.mxu0 0
    %1054 = vmatpush1.bf16.msra.mxu0 0
    %1055 = vmatprep.subr.bf16.mxu0 0
    %1056 = vmatpush1.bf16.msra.mxu0 0
    %1057 = vmatprep.subr.bf16.mxu0 0
    %1058 = vmatpush1.bf16.msra.mxu0 0
    %1059 = vmatprep.subr.bf16.mxu0 0
    %1060 = vmatpush1.bf16.msra.mxu0 0
    %1061 = vmatprep.subr.bf16.mxu0 0
    %1062 = vmatpush1.bf16.msra.mxu0 0
    %1063 = vmatprep.subr.bf16.mxu0 0
    %1064 = vmatpush1.bf16.msra.mxu0 0
    %1065 = vmatprep.subr.bf16.mxu0 0
    %1066 = vmatpush1.bf16.msra.mxu0 0
    %1067 = vmatprep.subr.bf16.mxu0 0
    %1068 = vmatpush1.bf16.msra.mxu0 0
    %1069 = vmatprep.subr.bf16.mxu0 0
    %1070 = vmatpush1.bf16.msra.mxu0 0
    %1071 = vmatprep.subr.bf16.mxu0 0
    %1072 = vmatpush1.bf16.msra.mxu0 0
    %1073 = vmatprep.subr.bf16.mxu0 0
    %1074 = vmatpush1.bf16.msra.mxu0 0
    %1075 = vmatprep.subr.bf16.mxu0 0
    %1076 = vmatpush1.bf16.msra.mxu0 0
    %1077 = vmatprep.mubr.bf16.mxu0 0
    %1078 = vmatmul.mubr.bf16.gmra.mrb[0].mxu0 %v1003
    %v1079 = vpop.f32.mrb[0].mxu0
    %v1080 = vadd.f32 0.0, %v1079
    %v1081 = vpop.f32.mrb[0].mxu0
    %v1082 = vpop.f32.mrb[0].mxu0
    %v1083 = vpop.f32.mrb[0].mxu0
    %1084 = vdwg.mxu0
    %v1086 = vrot.slane %v1080, 1
    %v1088 = vadd.f32 %v174, %v1086
    %v1089 = vtanh.pop %v1088
    %v1090 = vxor.u32 %v1088, 2147483648
    %v1091 = vmul.f32 %v1090, 1.442695
    %v1092 = vpow.pop %v1091
    %v1093 = vadd.f32 %v1092, 1.0
    %v1094 = vrcp.pop %v1093
    %v1095 = vmul.f32 1.0, %v1094
    %v1096 = vsel %vm102, %v1089, %v1095
    %v1098 = vrot.slane %v990, 7
    %v1100 = vmul.f32 %v1096, %v1098
    %1102 = vrot.lane.b32.xlu0 %v1096, 64
    %v1103 = vpop.permute.xlu0 %1102
    %v1105 = vmul.f32 %v1096, %v1103
    %1107 = vrot.lane.b32.xlu0 %v1105, 32
    %v1108 = vpop.permute.xlu0 %1107
    %v1110 = vadd.f32 %v1100, %v1108
    %v1111 = vtanh.pop %v1110
    %1113 = vrot.lane.b32.xlu0 %v1111, 64
    %v1114 = vpop.permute.xlu0 %1113
    %v1116 = vmul.f32 %v1096, %v1114
    %v1117 = vpack.c.bf16 %v1116, %v1116
    %v1119 = vshrl.u32 %v1117, 16
    %v1121 = vrot.slane %v1119, 3
    %1122 = vrot.lane.b32.xlu0 %v1121, 32
    %v1123 = vpop.permute.xlu0 %1122
    %v1125 = vsel %vm191, %v1123, 0
    %1127 = vmatprep.subr.bf16.mxu0 0
    %1128 = vmatpush1.bf16.msra.mxu0 %v273
    %1129 = vmatprep.subr.bf16.mxu0 0
    %1130 = vmatpush1.bf16.msra.mxu0 %v274
    %1131 = vmatprep.subr.bf16.mxu0 0
    %1132 = vmatpush1.bf16.msra.mxu0 0
    %1133 = vmatprep.subr.bf16.mxu0 0
    %1134 = vmatpush1.bf16.msra.mxu0 0
    %1135 = vmatprep.subr.bf16.mxu0 0
    %1136 = vmatpush1.bf16.msra.mxu0 0
    %1137 = vmatprep.subr.bf16.mxu0 0
    %1138 = vmatpush1.bf16.msra.mxu0 0
    %1139 = vmatprep.subr.bf16.mxu0 0
    %1140 = vmatpush1.bf16.msra.mxu0 0
    %1141 = vmatprep.subr.bf16.mxu0 0
    %1142 = vmatpush1.bf16.msra.mxu0 0
    %1143 = vmatprep.subr.bf16.mxu0 0
    %1144 = vmatpush1.bf16.msra.mxu0 0
    %1145 = vmatprep.subr.bf16.mxu0 0
    %1146 = vmatpush1.bf16.msra.mxu0 0
    %1147 = vmatprep.subr.bf16.mxu0 0
    %1148 = vmatpush1.bf16.msra.mxu0 0
    %1149 = vmatprep.subr.bf16.mxu0 0
    %1150 = vmatpush1.bf16.msra.mxu0 0
    %1151 = vmatprep.subr.bf16.mxu0 0
    %1152 = vmatpush1.bf16.msra.mxu0 0
    %1153 = vmatprep.subr.bf16.mxu0 0
    %1154 = vmatpush1.bf16.msra.mxu0 0
    %1155 = vmatprep.subr.bf16.mxu0 0
    %1156 = vmatpush1.bf16.msra.mxu0 0
    %1157 = vmatprep.subr.bf16.mxu0 0
    %1158 = vmatpush1.bf16.msra.mxu0 0
    %1159 = vmatprep.mubr.bf16.mxu0 0
    %1160 = vmatmul.mubr.bf16.gmra.mrb[0].mxu0 %v1125
    %v1161 = vpop.f32.mrb[0].mxu0
    %v1162 = vadd.f32 %v119, %v1161
    %v1163 = vpop.f32.mrb[0].mxu0
    %v1164 = vpop.f32.mrb[0].mxu0
    %v1165 = vpop.f32.mrb[0].mxu0
    %1166 = vdwg.mxu0
    %v1171 = vunpack.c.l.b16 %v111
    %v1172 = vunpack.c.l.b16 %v112
    %v1173 = vunpack.c.l.b16 %v113
    %v1174 = vunpack.c.l.b16 %v114
    %v1175 = vpack.c.b16 %v1172, %v1171
    %v1176 = vpack.c.b16 %v1174, %v1173
    %1179 = vmatprep.subr.bf16.mxu0 0
    %1180 = vmatpush1.bf16.msra.mxu0 %v1175
    %1181 = vmatprep.subr.bf16.mxu0 0
    %1182 = vmatpush1.bf16.msra.mxu0 %v1176
    %1183 = vmatprep.subr.bf16.mxu0 0
    %1184 = vmatpush1.bf16.msra.mxu0 0
    %1185 = vmatprep.subr.bf16.mxu0 0
    %1186 = vmatpush1.bf16.msra.mxu0 0
    %1187 = vmatprep.subr.bf16.mxu0 0
    %1188 = vmatpush1.bf16.msra.mxu0 0
    %1189 = vmatprep.subr.bf16.mxu0 0
    %1190 = vmatpush1.bf16.msra.mxu0 0
    %1191 = vmatprep.subr.bf16.mxu0 0
    %1192 = vmatpush1.bf16.msra.mxu0 0
    %1193 = vmatprep.subr.bf16.mxu0 0
    %1194 = vmatpush1.bf16.msra.mxu0 0
    %1195 = vmatprep.subr.bf16.mxu0 0
    %1196 = vmatpush1.bf16.msra.mxu0 0
    %1197 = vmatprep.subr.bf16.mxu0 0
    %1198 = vmatpush1.bf16.msra.mxu0 0
    %1199 = vmatprep.subr.bf16.mxu0 0
    %1200 = vmatpush1.bf16.msra.mxu0 0
    %1201 = vmatprep.subr.bf16.mxu0 0
    %1202 = vmatpush1.bf16.msra.mxu0 0
    %1203 = vmatprep.subr.bf16.mxu0 0
    %1204 = vmatpush1.bf16.msra.mxu0 0
    %1205 = vmatprep.subr.bf16.mxu0 0
    %1206 = vmatpush1.bf16.msra.mxu0 0
    %1207 = vmatprep.subr.bf16.mxu0 0
    %1208 = vmatpush1.bf16.msra.mxu0 0
    %1209 = vmatprep.subr.bf16.mxu0 0
    %1210 = vmatpush1.bf16.msra.mxu0 0
    %1211 = vmatprep.mubr.bf16.mxu0 0
    %1212 = vmatmul.mubr.bf16.gmra.mrb[0].mxu0 %v1125
    %v1213 = vpop.f32.mrb[0].mxu0
    %v1214 = vadd.f32 0.0, %v1213
    %v1215 = vpop.f32.mrb[0].mxu0
    %v1216 = vpop.f32.mrb[0].mxu0
    %v1217 = vpop.f32.mrb[0].mxu0
    %1218 = vdwg.mxu0
    %v1219 = vadd.f32 %v315, %v1214
    %v1220 = vtanh.pop %v1219
    %v1221 = vxor.u32 %v1219, 2147483648
    %v1222 = vmul.f32 %v1221, 1.442695
    %v1223 = vpow.pop %v1222
    %v1224 = vadd.f32 %v1223, 1.0
    %v1225 = vrcp.pop %v1224
    %v1226 = vmul.f32 1.0, %v1225
    %v1227 = vsel %vm102, %v1220, %v1226
    %v1229 = vrot.slane %v1110, 7
    %v1231 = vmul.f32 %v1227, %v1229
    %1233 = vrot.lane.b32.xlu0 %v1227, 64
    %v1234 = vpop.permute.xlu0 %1233
    %v1236 = vmul.f32 %v1227, %v1234
    %1238 = vrot.lane.b32.xlu0 %v1236, 32
    %v1239 = vpop.permute.xlu0 %1238
    %v1241 = vadd.f32 %v1231, %v1239
    %v1242 = vtanh.pop %v1241
    %1244 = vrot.lane.b32.xlu0 %v1242, 64
    %v1245 = vpop.permute.xlu0 %1244
    %v1247 = vmul.f32 %v1227, %v1245
    %v1248 = vpack.c.bf16 %v1247, %v1247
    %1250 = vrot.lane.b32.xlu0 %v1248, 32
    %v1251 = vpop.permute.xlu0 %1250
    %v1256 = vunpack.c.l.b16 %v115
    %v1257 = vunpack.c.l.b16 %v116
    %v1258 = vunpack.c.l.b16 %v117
    %v1259 = vunpack.c.l.b16 %v118
    %v1260 = vpack.c.b16 %v1257, %v1256
    %v1261 = vpack.c.b16 %v1259, %v1258
    %v1265 = vsel %vm191, %v1251, 0
    %1267 = vmatprep.subr.bf16.mxu0 0
    %1268 = vmatpush1.bf16.msra.mxu0 %v1260
    %1269 = vmatprep.subr.bf16.mxu0 0
    %1270 = vmatpush1.bf16.msra.mxu0 %v1261
    %1271 = vmatprep.subr.bf16.mxu0 0
    %1272 = vmatpush1.bf16.msra.mxu0 0
    %1273 = vmatprep.subr.bf16.mxu0 0
    %1274 = vmatpush1.bf16.msra.mxu0 0
    %1275 = vmatprep.subr.bf16.mxu0 0
    %1276 = vmatpush1.bf16.msra.mxu0 0
    %1277 = vmatprep.subr.bf16.mxu0 0
    %1278 = vmatpush1.bf16.msra.mxu0 0
    %1279 = vmatprep.subr.bf16.mxu0 0
    %1280 = vmatpush1.bf16.msra.mxu0 0
    %1281 = vmatprep.subr.bf16.mxu0 0
    %1282 = vmatpush1.bf16.msra.mxu0 0
    %1283 = vmatprep.subr.bf16.mxu0 0
    %1284 = vmatpush1.bf16.msra.mxu0 0
    %1285 = vmatprep.subr.bf16.mxu0 0
    %1286 = vmatpush1.bf16.msra.mxu0 0
    %1287 = vmatprep.subr.bf16.mxu0 0
    %1288 = vmatpush1.bf16.msra.mxu0 0
    %1289 = vmatprep.subr.bf16.mxu0 0
    %1290 = vmatpush1.bf16.msra.mxu0 0
    %1291 = vmatprep.subr.bf16.mxu0 0
    %1292 = vmatpush1.bf16.msra.mxu0 0
    %1293 = vmatprep.subr.bf16.mxu0 0
    %1294 = vmatpush1.bf16.msra.mxu0 0
    %1295 = vmatprep.subr.bf16.mxu0 0
    %1296 = vmatpush1.bf16.msra.mxu0 0
    %1297 = vmatprep.subr.bf16.mxu0 0
    %1298 = vmatpush1.bf16.msra.mxu0 0
    %1299 = vmatprep.mubr.bf16.mxu0 0
    %1300 = vmatmul.mubr.bf16.gmra.mrb[0].mxu0 %v1265
    %v1301 = vpop.f32.mrb[0].mxu0
    %v1302 = vadd.f32 %v120, %v1301
    %v1303 = vpop.f32.mrb[0].mxu0
    %v1304 = vpop.f32.mrb[0].mxu0
    %v1305 = vpop.f32.mrb[0].mxu0
    %1306 = vdwg.mxu0
    %1307 = vmatprep.subr.bf16.mxu0 0
    %1308 = vmatpush1.bf16.msra.mxu0 %v1175
    %1309 = vmatprep.subr.bf16.mxu0 0
    %1310 = vmatpush1.bf16.msra.mxu0 %v1176
    %1311 = vmatprep.subr.bf16.mxu0 0
    %1312 = vmatpush1.bf16.msra.mxu0 0
    %1313 = vmatprep.subr.bf16.mxu0 0
    %1314 = vmatpush1.bf16.msra.mxu0 0
    %1315 = vmatprep.subr.bf16.mxu0 0
    %1316 = vmatpush1.bf16.msra.mxu0 0
    %1317 = vmatprep.subr.bf16.mxu0 0
    %1318 = vmatpush1.bf16.msra.mxu0 0
    %1319 = vmatprep.subr.bf16.mxu0 0
    %1320 = vmatpush1.bf16.msra.mxu0 0
    %1321 = vmatprep.subr.bf16.mxu0 0
    %1322 = vmatpush1.bf16.msra.mxu0 0
    %1323 = vmatprep.subr.bf16.mxu0 0
    %1324 = vmatpush1.bf16.msra.mxu0 0
    %1325 = vmatprep.subr.bf16.mxu0 0
    %1326 = vmatpush1.bf16.msra.mxu0 0
    %1327 = vmatprep.subr.bf16.mxu0 0
    %1328 = vmatpush1.bf16.msra.mxu0 0
    %1329 = vmatprep.subr.bf16.mxu0 0
    %1330 = vmatpush1.bf16.msra.mxu0 0
    %1331 = vmatprep.subr.bf16.mxu0 0
    %1332 = vmatpush1.bf16.msra.mxu0 0
    %1333 = vmatprep.subr.bf16.mxu0 0
    %1334 = vmatpush1.bf16.msra.mxu0 0
    %1335 = vmatprep.subr.bf16.mxu0 0
    %1336 = vmatpush1.bf16.msra.mxu0 0
    %1337 = vmatprep.subr.bf16.mxu0 0
    %1338 = vmatpush1.bf16.msra.mxu0 0
    %1339 = vmatprep.mubr.bf16.mxu0 0
    %1340 = vmatmul.mubr.bf16.gmra.mrb[0].mxu0 %v1265
    %v1341 = vpop.f32.mrb[0].mxu0
    %v1342 = vadd.f32 0.0, %v1341
    %v1343 = vpop.f32.mrb[0].mxu0
    %v1344 = vpop.f32.mrb[0].mxu0
    %v1345 = vpop.f32.mrb[0].mxu0
    %1346 = vdwg.mxu0
    %v1347 = vadd.f32 %v436, %v1342
    %v1348 = vtanh.pop %v1347
    %v1349 = vxor.u32 %v1347, 2147483648
    %v1350 = vmul.f32 %v1349, 1.442695
    %v1351 = vpow.pop %v1350
    %v1352 = vadd.f32 %v1351, 1.0
    %v1353 = vrcp.pop %v1352
    %v1354 = vmul.f32 1.0, %v1353
    %v1355 = vsel %vm102, %v1348, %v1354
    %v1356 = vmul.f32 %v1355, %v1241
    %1358 = vrot.lane.b32.xlu0 %v1355, 64
    %v1359 = vpop.permute.xlu0 %1358
    %v1361 = vmul.f32 %v1355, %v1359
    %1363 = vrot.lane.b32.xlu0 %v1361, 32
    %v1364 = vpop.permute.xlu0 %1363
    %v1366 = vadd.f32 %v1356, %v1364
    %v1367 = vtanh.pop %v1366
    %1369 = vrot.lane.b32.xlu0 %v1367, 64
    %v1370 = vpop.permute.xlu0 %1369
    %v1372 = vmul.f32 %v1355, %v1370
    %v1373 = vpack.c.bf16 %v1372, %v1372
    %1375 = vrot.lane.b32.xlu0 %v1373, 32
    %v1376 = vpop.permute.xlu0 %1375
    %v1378 = vsel %vm191, %v1376, 0
    %1380 = vmatprep.subr.bf16.mxu0 0
    %1381 = vmatpush1.bf16.msra.mxu0 %v1260
    %1382 = vmatprep.subr.bf16.mxu0 0
    %1383 = vmatpush1.bf16.msra.mxu0 %v1261
    %1384 = vmatprep.subr.bf16.mxu0 0
    %1385 = vmatpush1.bf16.msra.mxu0 0
    %1386 = vmatprep.subr.bf16.mxu0 0
    %1387 = vmatpush1.bf16.msra.mxu0 0
    %1388 = vmatprep.subr.bf16.mxu0 0
    %1389 = vmatpush1.bf16.msra.mxu0 0
    %1390 = vmatprep.subr.bf16.mxu0 0
    %1391 = vmatpush1.bf16.msra.mxu0 0
    %1392 = vmatprep.subr.bf16.mxu0 0
    %1393 = vmatpush1.bf16.msra.mxu0 0
    %1394 = vmatprep.subr.bf16.mxu0 0
    %1395 = vmatpush1.bf16.msra.mxu0 0
    %1396 = vmatprep.subr.bf16.mxu0 0
    %1397 = vmatpush1.bf16.msra.mxu0 0
    %1398 = vmatprep.subr.bf16.mxu0 0
    %1399 = vmatpush1.bf16.msra.mxu0 0
    %1400 = vmatprep.subr.bf16.mxu0 0
    %1401 = vmatpush1.bf16.msra.mxu0 0
    %1402 = vmatprep.subr.bf16.mxu0 0
    %1403 = vmatpush1.bf16.msra.mxu0 0
    %1404 = vmatprep.subr.bf16.mxu0 0
    %1405 = vmatpush1.bf16.msra.mxu0 0
    %1406 = vmatprep.subr.bf16.mxu0 0
    %1407 = vmatpush1.bf16.msra.mxu0 0
    %1408 = vmatprep.subr.bf16.mxu0 0
    %1409 = vmatpush1.bf16.msra.mxu0 0
    %1410 = vmatprep.subr.bf16.mxu0 0
    %1411 = vmatpush1.bf16.msra.mxu0 0
    %1412 = vmatprep.mubr.bf16.mxu0 0
    %1413 = vmatmul.mubr.bf16.gmra.mrb[0].mxu0 %v1378
    %v1414 = vpop.f32.mrb[0].mxu0
    %v1415 = vadd.f32 %v120, %v1414
    %v1416 = vpop.f32.mrb[0].mxu0
    %v1417 = vpop.f32.mrb[0].mxu0
    %v1418 = vpop.f32.mrb[0].mxu0
    %1419 = vdwg.mxu0
    %1420 = vmatprep.subr.bf16.mxu0 0
    %1421 = vmatpush1.bf16.msra.mxu0 %v1175
    %1422 = vmatprep.subr.bf16.mxu0 0
    %1423 = vmatpush1.bf16.msra.mxu0 %v1176
    %1424 = vmatprep.subr.bf16.mxu0 0
    %1425 = vmatpush1.bf16.msra.mxu0 0
    %1426 = vmatprep.subr.bf16.mxu0 0
    %1427 = vmatpush1.bf16.msra.mxu0 0
    %1428 = vmatprep.subr.bf16.mxu0 0
    %1429 = vmatpush1.bf16.msra.mxu0 0
    %1430 = vmatprep.subr.bf16.mxu0 0
    %1431 = vmatpush1.bf16.msra.mxu0 0
    %1432 = vmatprep.subr.bf16.mxu0 0
    %1433 = vmatpush1.bf16.msra.mxu0 0
    %1434 = vmatprep.subr.bf16.mxu0 0
    %1435 = vmatpush1.bf16.msra.mxu0 0
    %1436 = vmatprep.subr.bf16.mxu0 0
    %1437 = vmatpush1.bf16.msra.mxu0 0
    %1438 = vmatprep.subr.bf16.mxu0 0
    %1439 = vmatpush1.bf16.msra.mxu0 0
    %1440 = vmatprep.subr.bf16.mxu0 0
    %1441 = vmatpush1.bf16.msra.mxu0 0
    %1442 = vmatprep.subr.bf16.mxu0 0
    %1443 = vmatpush1.bf16.msra.mxu0 0
    %1444 = vmatprep.subr.bf16.mxu0 0
    %1445 = vmatpush1.bf16.msra.mxu0 0
    %1446 = vmatprep.subr.bf16.mxu0 0
    %1447 = vmatpush1.bf16.msra.mxu0 0
    %1448 = vmatprep.subr.bf16.mxu0 0
    %1449 = vmatpush1.bf16.msra.mxu0 0
    %1450 = vmatprep.subr.bf16.mxu0 0
    %1451 = vmatpush1.bf16.msra.mxu0 0
    %1452 = vmatprep.mubr.bf16.mxu0 0
    %1453 = vmatmul.mubr.bf16.gmra.mrb[0].mxu0 %v1378
    %v1454 = vpop.f32.mrb[0].mxu0
    %v1455 = vadd.f32 0.0, %v1454
    %v1456 = vpop.f32.mrb[0].mxu0
    %v1457 = vpop.f32.mrb[0].mxu0
    %v1458 = vpop.f32.mrb[0].mxu0
    %1459 = vdwg.mxu0
    %v1460 = vadd.f32 %v556, %v1455
    %v1461 = vtanh.pop %v1460
    %v1462 = vxor.u32 %v1460, 2147483648
    %v1463 = vmul.f32 %v1462, 1.442695
    %v1464 = vpow.pop %v1463
    %v1465 = vadd.f32 %v1464, 1.0
    %v1466 = vrcp.pop %v1465
    %v1467 = vmul.f32 1.0, %v1466
    %v1468 = vsel %vm102, %v1461, %v1467
    %v1469 = vmul.f32 %v1468, %v1366
    %1471 = vrot.lane.b32.xlu0 %v1468, 64
    %v1472 = vpop.permute.xlu0 %1471
    %v1474 = vmul.f32 %v1468, %v1472
    %1476 = vrot.lane.b32.xlu0 %v1474, 32
    %v1477 = vpop.permute.xlu0 %1476
    %v1479 = vadd.f32 %v1469, %v1477
    %v1480 = vtanh.pop %v1479
    %1482 = vrot.lane.b32.xlu0 %v1480, 64
    %v1483 = vpop.permute.xlu0 %1482
    %v1485 = vmul.f32 %v1468, %v1483
    %v1486 = vpack.c.bf16 %v1485, %v1485
    %1488 = vrot.lane.b32.xlu0 %v1486, 32
    %v1489 = vpop.permute.xlu0 %1488
    %v1491 = vsel %vm191, %v1489, 0
    %1493 = vmatprep.subr.bf16.mxu0 0
    %1494 = vmatpush1.bf16.msra.mxu0 %v1260
    %1495 = vmatprep.subr.bf16.mxu0 0
    %1496 = vmatpush1.bf16.msra.mxu0 %v1261
    %1497 = vmatprep.subr.bf16.mxu0 0
    %1498 = vmatpush1.bf16.msra.mxu0 0
    %1499 = vmatprep.subr.bf16.mxu0 0
    %1500 = vmatpush1.bf16.msra.mxu0 0
    %1501 = vmatprep.subr.bf16.mxu0 0
    %1502 = vmatpush1.bf16.msra.mxu0 0
    %1503 = vmatprep.subr.bf16.mxu0 0
    %1504 = vmatpush1.bf16.msra.mxu0 0
    %1505 = vmatprep.subr.bf16.mxu0 0
    %1506 = vmatpush1.bf16.msra.mxu0 0
    %1507 = vmatprep.subr.bf16.mxu0 0
    %1508 = vmatpush1.bf16.msra.mxu0 0
    %1509 = vmatprep.subr.bf16.mxu0 0
    %1510 = vmatpush1.bf16.msra.mxu0 0
    %1511 = vmatprep.subr.bf16.mxu0 0
    %1512 = vmatpush1.bf16.msra.mxu0 0
    %1513 = vmatprep.subr.bf16.mxu0 0
    %1514 = vmatpush1.bf16.msra.mxu0 0
    %1515 = vmatprep.subr.bf16.mxu0 0
    %1516 = vmatpush1.bf16.msra.mxu0 0
    %1517 = vmatprep.subr.bf16.mxu0 0
    %1518 = vmatpush1.bf16.msra.mxu0 0
    %1519 = vmatprep.subr.bf16.mxu0 0
    %1520 = vmatpush1.bf16.msra.mxu0 0
    %1521 = vmatprep.subr.bf16.mxu0 0
    %1522 = vmatpush1.bf16.msra.mxu0 0
    %1523 = vmatprep.subr.bf16.mxu0 0
    %1524 = vmatpush1.bf16.msra.mxu0 0
    %1525 = vmatprep.mubr.bf16.mxu0 0
    %1526 = vmatmul.mubr.bf16.gmra.mrb[0].mxu0 %v1491
    %v1527 = vpop.f32.mrb[0].mxu0
    %v1528 = vadd.f32 %v120, %v1527
    %v1529 = vpop.f32.mrb[0].mxu0
    %v1530 = vpop.f32.mrb[0].mxu0
    %v1531 = vpop.f32.mrb[0].mxu0
    %1532 = vdwg.mxu0
    %1533 = vmatprep.subr.bf16.mxu0 0
    %1534 = vmatpush1.bf16.msra.mxu0 %v1175
    %1535 = vmatprep.subr.bf16.mxu0 0
    %1536 = vmatpush1.bf16.msra.mxu0 %v1176
    %1537 = vmatprep.subr.bf16.mxu0 0
    %1538 = vmatpush1.bf16.msra.mxu0 0
    %1539 = vmatprep.subr.bf16.mxu0 0
    %1540 = vmatpush1.bf16.msra.mxu0 0
    %1541 = vmatprep.subr.bf16.mxu0 0
    %1542 = vmatpush1.bf16.msra.mxu0 0
    %1543 = vmatprep.subr.bf16.mxu0 0
    %1544 = vmatpush1.bf16.msra.mxu0 0
    %1545 = vmatprep.subr.bf16.mxu0 0
    %1546 = vmatpush1.bf16.msra.mxu0 0
    %1547 = vmatprep.subr.bf16.mxu0 0
    %1548 = vmatpush1.bf16.msra.mxu0 0
    %1549 = vmatprep.subr.bf16.mxu0 0
    %1550 = vmatpush1.bf16.msra.mxu0 0
    %1551 = vmatprep.subr.bf16.mxu0 0
    %1552 = vmatpush1.bf16.msra.mxu0 0
    %1553 = vmatprep.subr.bf16.mxu0 0
    %1554 = vmatpush1.bf16.msra.mxu0 0
    %1555 = vmatprep.subr.bf16.mxu0 0
    %1556 = vmatpush1.bf16.msra.mxu0 0
    %1557 = vmatprep.subr.bf16.mxu0 0
    %1558 = vmatpush1.bf16.msra.mxu0 0
    %1559 = vmatprep.subr.bf16.mxu0 0
    %1560 = vmatpush1.bf16.msra.mxu0 0
    %1561 = vmatprep.subr.bf16.mxu0 0
    %1562 = vmatpush1.bf16.msra.mxu0 0
    %1563 = vmatprep.subr.bf16.mxu0 0
    %1564 = vmatpush1.bf16.msra.mxu0 0
    %1565 = vmatprep.mubr.bf16.mxu0 0
    %1566 = vmatmul.mubr.bf16.gmra.mrb[0].mxu0 %v1491
    %v1567 = vpop.f32.mrb[0].mxu0
    %v1568 = vadd.f32 0.0, %v1567
    %v1569 = vpop.f32.mrb[0].mxu0
    %v1570 = vpop.f32.mrb[0].mxu0
    %v1571 = vpop.f32.mrb[0].mxu0
    %1572 = vdwg.mxu0
    %v1573 = vadd.f32 %v678, %v1568
    %v1574 = vtanh.pop %v1573
    %v1575 = vxor.u32 %v1573, 2147483648
    %v1576 = vmul.f32 %v1575, 1.442695
    %v1577 = vpow.pop %v1576
    %v1578 = vadd.f32 %v1577, 1.0
    %v1579 = vrcp.pop %v1578
    %v1580 = vmul.f32 1.0, %v1579
    %v1581 = vsel %vm102, %v1574, %v1580
    %v1582 = vmul.f32 %v1581, %v1479
    %1584 = vrot.lane.b32.xlu0 %v1581, 64
    %v1585 = vpop.permute.xlu0 %1584
    %v1587 = vmul.f32 %v1581, %v1585
    %1589 = vrot.lane.b32.xlu0 %v1587, 32
    %v1590 = vpop.permute.xlu0 %1589
    %v1592 = vadd.f32 %v1582, %v1590
    %v1593 = vtanh.pop %v1592
    %1595 = vrot.lane.b32.xlu0 %v1593, 64
    %v1596 = vpop.permute.xlu0 %1595
    %v1598 = vmul.f32 %v1581, %v1596
    %v1599 = vpack.c.bf16 %v1598, %v1598
    %1601 = vrot.lane.b32.xlu0 %v1599, 32
    %v1602 = vpop.permute.xlu0 %1601
    %v1604 = vsel %vm191, %v1602, 0
    %1606 = vmatprep.subr.bf16.mxu0 0
    %1607 = vmatpush1.bf16.msra.mxu0 %v1260
    %1608 = vmatprep.subr.bf16.mxu0 0
    %1609 = vmatpush1.bf16.msra.mxu0 %v1261
    %1610 = vmatprep.subr.bf16.mxu0 0
    %1611 = vmatpush1.bf16.msra.mxu0 0
    %1612 = vmatprep.subr.bf16.mxu0 0
    %1613 = vmatpush1.bf16.msra.mxu0 0
    %1614 = vmatprep.subr.bf16.mxu0 0
    %1615 = vmatpush1.bf16.msra.mxu0 0
    %1616 = vmatprep.subr.bf16.mxu0 0
    %1617 = vmatpush1.bf16.msra.mxu0 0
    %1618 = vmatprep.subr.bf16.mxu0 0
    %1619 = vmatpush1.bf16.msra.mxu0 0
    %1620 = vmatprep.subr.bf16.mxu0 0
    %1621 = vmatpush1.bf16.msra.mxu0 0
    %1622 = vmatprep.subr.bf16.mxu0 0
    %1623 = vmatpush1.bf16.msra.mxu0 0
    %1624 = vmatprep.subr.bf16.mxu0 0
    %1625 = vmatpush1.bf16.msra.mxu0 0
    %1626 = vmatprep.subr.bf16.mxu0 0
    %1627 = vmatpush1.bf16.msra.mxu0 0
    %1628 = vmatprep.subr.bf16.mxu0 0
    %1629 = vmatpush1.bf16.msra.mxu0 0
    %1630 = vmatprep.subr.bf16.mxu0 0
    %1631 = vmatpush1.bf16.msra.mxu0 0
    %1632 = vmatprep.subr.bf16.mxu0 0
    %1633 = vmatpush1.bf16.msra.mxu0 0
    %1634 = vmatprep.subr.bf16.mxu0 0
    %1635 = vmatpush1.bf16.msra.mxu0 0
    %1636 = vmatprep.subr.bf16.mxu0 0
    %1637 = vmatpush1.bf16.msra.mxu0 0
    %1638 = vmatprep.mubr.bf16.mxu0 0
    %1639 = vmatmul.mubr.bf16.gmra.mrb[0].mxu0 %v1604
    %v1640 = vpop.f32.mrb[0].mxu0
    %v1641 = vadd.f32 %v120, %v1640
    %v1642 = vpop.f32.mrb[0].mxu0
    %v1643 = vpop.f32.mrb[0].mxu0
    %v1644 = vpop.f32.mrb[0].mxu0
    %1645 = vdwg.mxu0
    %1646 = vmatprep.subr.bf16.mxu0 0
    %1647 = vmatpush1.bf16.msra.mxu0 %v1175
    %1648 = vmatprep.subr.bf16.mxu0 0
    %1649 = vmatpush1.bf16.msra.mxu0 %v1176
    %1650 = vmatprep.subr.bf16.mxu0 0
    %1651 = vmatpush1.bf16.msra.mxu0 0
    %1652 = vmatprep.subr.bf16.mxu0 0
    %1653 = vmatpush1.bf16.msra.mxu0 0
    %1654 = vmatprep.subr.bf16.mxu0 0
    %1655 = vmatpush1.bf16.msra.mxu0 0
    %1656 = vmatprep.subr.bf16.mxu0 0
    %1657 = vmatpush1.bf16.msra.mxu0 0
    %1658 = vmatprep.subr.bf16.mxu0 0
    %1659 = vmatpush1.bf16.msra.mxu0 0
    %1660 = vmatprep.subr.bf16.mxu0 0
    %1661 = vmatpush1.bf16.msra.mxu0 0
    %1662 = vmatprep.subr.bf16.mxu0 0
    %1663 = vmatpush1.bf16.msra.mxu0 0
    %1664 = vmatprep.subr.bf16.mxu0 0
    %1665 = vmatpush1.bf16.msra.mxu0 0
    %1666 = vmatprep.subr.bf16.mxu0 0
    %1667 = vmatpush1.bf16.msra.mxu0 0
    %1668 = vmatprep.subr.bf16.mxu0 0
    %1669 = vmatpush1.bf16.msra.mxu0 0
    %1670 = vmatprep.subr.bf16.mxu0 0
    %1671 = vmatpush1.bf16.msra.mxu0 0
    %1672 = vmatprep.subr.bf16.mxu0 0
    %1673 = vmatpush1.bf16.msra.mxu0 0
    %1674 = vmatprep.subr.bf16.mxu0 0
    %1675 = vmatpush1.bf16.msra.mxu0 0
    %1676 = vmatprep.subr.bf16.mxu0 0
    %1677 = vmatpush1.bf16.msra.mxu0 0
    %1678 = vmatprep.mubr.bf16.mxu0 0
    %1679 = vmatmul.mubr.bf16.gmra.mrb[0].mxu0 %v1604
    %v1680 = vpop.f32.mrb[0].mxu0
    %v1681 = vadd.f32 0.0, %v1680
    %v1682 = vpop.f32.mrb[0].mxu0
    %v1683 = vpop.f32.mrb[0].mxu0
    %v1684 = vpop.f32.mrb[0].mxu0
    %1685 = vdwg.mxu0
    %v1686 = vadd.f32 %v798, %v1681
    %v1687 = vtanh.pop %v1686
    %v1688 = vxor.u32 %v1686, 2147483648
    %v1689 = vmul.f32 %v1688, 1.442695
    %v1690 = vpow.pop %v1689
    %v1691 = vadd.f32 %v1690, 1.0
    %v1692 = vrcp.pop %v1691
    %v1693 = vmul.f32 1.0, %v1692
    %v1694 = vsel %vm102, %v1687, %v1693
    %v1695 = vmul.f32 %v1694, %v1592
    %1697 = vrot.lane.b32.xlu0 %v1694, 64
    %v1698 = vpop.permute.xlu0 %1697
    %v1700 = vmul.f32 %v1694, %v1698
    %1702 = vrot.lane.b32.xlu0 %v1700, 32
    %v1703 = vpop.permute.xlu0 %1702
    %v1705 = vadd.f32 %v1695, %v1703
    %v1706 = vtanh.pop %v1705
    %1708 = vrot.lane.b32.xlu0 %v1706, 64
    %v1709 = vpop.permute.xlu0 %1708
    %v1711 = vmul.f32 %v1694, %v1709
    %v1712 = vpack.c.bf16 %v1711, %v1711
    %1714 = vrot.lane.b32.xlu0 %v1712, 32
    %v1715 = vpop.permute.xlu0 %1714
    %v1717 = vsel %vm191, %v1715, 0
    %1719 = vmatprep.subr.bf16.mxu0 0
    %1720 = vmatpush1.bf16.msra.mxu0 %v1260
    %1721 = vmatprep.subr.bf16.mxu0 0
    %1722 = vmatpush1.bf16.msra.mxu0 %v1261
    %1723 = vmatprep.subr.bf16.mxu0 0
    %1724 = vmatpush1.bf16.msra.mxu0 0
    %1725 = vmatprep.subr.bf16.mxu0 0
    %1726 = vmatpush1.bf16.msra.mxu0 0
    %1727 = vmatprep.subr.bf16.mxu0 0
    %1728 = vmatpush1.bf16.msra.mxu0 0
    %1729 = vmatprep.subr.bf16.mxu0 0
    %1730 = vmatpush1.bf16.msra.mxu0 0
    %1731 = vmatprep.subr.bf16.mxu0 0
    %1732 = vmatpush1.bf16.msra.mxu0 0
    %1733 = vmatprep.subr.bf16.mxu0 0
    %1734 = vmatpush1.bf16.msra.mxu0 0
    %1735 = vmatprep.subr.bf16.mxu0 0
    %1736 = vmatpush1.bf16.msra.mxu0 0
    %1737 = vmatprep.subr.bf16.mxu0 0
    %1738 = vmatpush1.bf16.msra.mxu0 0
    %1739 = vmatprep.subr.bf16.mxu0 0
    %1740 = vmatpush1.bf16.msra.mxu0 0
    %1741 = vmatprep.subr.bf16.mxu0 0
    %1742 = vmatpush1.bf16.msra.mxu0 0
    %1743 = vmatprep.subr.bf16.mxu0 0
    %1744 = vmatpush1.bf16.msra.mxu0 0
    %1745 = vmatprep.subr.bf16.mxu0 0
    %1746 = vmatpush1.bf16.msra.mxu0 0
    %1747 = vmatprep.subr.bf16.mxu0 0
    %1748 = vmatpush1.bf16.msra.mxu0 0
    %1749 = vmatprep.subr.bf16.mxu0 0
    %1750 = vmatpush1.bf16.msra.mxu0 0
    %1751 = vmatprep.mubr.bf16.mxu0 0
    %1752 = vmatmul.mubr.bf16.gmra.mrb[0].mxu0 %v1717
    %v1753 = vpop.f32.mrb[0].mxu0
    %v1754 = vadd.f32 %v120, %v1753
    %v1755 = vpop.f32.mrb[0].mxu0
    %v1756 = vpop.f32.mrb[0].mxu0
    %v1757 = vpop.f32.mrb[0].mxu0
    %1758 = vdwg.mxu0
    %1759 = vmatprep.subr.bf16.mxu0 0
    %1760 = vmatpush1.bf16.msra.mxu0 %v1175
    %1761 = vmatprep.subr.bf16.mxu0 0
    %1762 = vmatpush1.bf16.msra.mxu0 %v1176
    %1763 = vmatprep.subr.bf16.mxu0 0
    %1764 = vmatpush1.bf16.msra.mxu0 0
    %1765 = vmatprep.subr.bf16.mxu0 0
    %1766 = vmatpush1.bf16.msra.mxu0 0
    %1767 = vmatprep.subr.bf16.mxu0 0
    %1768 = vmatpush1.bf16.msra.mxu0 0
    %1769 = vmatprep.subr.bf16.mxu0 0
    %1770 = vmatpush1.bf16.msra.mxu0 0
    %1771 = vmatprep.subr.bf16.mxu0 0
    %1772 = vmatpush1.bf16.msra.mxu0 0
    %1773 = vmatprep.subr.bf16.mxu0 0
    %1774 = vmatpush1.bf16.msra.mxu0 0
    %1775 = vmatprep.subr.bf16.mxu0 0
    %1776 = vmatpush1.bf16.msra.mxu0 0
    %1777 = vmatprep.subr.bf16.mxu0 0
    %1778 = vmatpush1.bf16.msra.mxu0 0
    %1779 = vmatprep.subr.bf16.mxu0 0
    %1780 = vmatpush1.bf16.msra.mxu0 0
    %1781 = vmatprep.subr.bf16.mxu0 0
    %1782 = vmatpush1.bf16.msra.mxu0 0
    %1783 = vmatprep.subr.bf16.mxu0 0
    %1784 = vmatpush1.bf16.msra.mxu0 0
    %1785 = vmatprep.subr.bf16.mxu0 0
    %1786 = vmatpush1.bf16.msra.mxu0 0
    %1787 = vmatprep.subr.bf16.mxu0 0
    %1788 = vmatpush1.bf16.msra.mxu0 0
    %1789 = vmatprep.subr.bf16.mxu0 0
    %1790 = vmatpush1.bf16.msra.mxu0 0
    %1791 = vmatprep.mubr.bf16.mxu0 0
    %1792 = vmatmul.mubr.bf16.gmra.mrb[0].mxu0 %v1717
    %v1793 = vpop.f32.mrb[0].mxu0
    %v1794 = vadd.f32 0.0, %v1793
    %v1795 = vpop.f32.mrb[0].mxu0
    %v1796 = vpop.f32.mrb[0].mxu0
    %v1797 = vpop.f32.mrb[0].mxu0
    %1798 = vdwg.mxu0
    %v1799 = vadd.f32 %v920, %v1794
    %v1800 = vtanh.pop %v1799
    %v1801 = vxor.u32 %v1799, 2147483648
    %v1802 = vmul.f32 %v1801, 1.442695
    %v1803 = vpow.pop %v1802
    %v1804 = vadd.f32 %v1803, 1.0
    %v1805 = vrcp.pop %v1804
    %v1806 = vmul.f32 1.0, %v1805
    %v1807 = vsel %vm102, %v1800, %v1806
    %v1808 = vmul.f32 %v1807, %v1705
    %1810 = vrot.lane.b32.xlu0 %v1807, 64
    %v1811 = vpop.permute.xlu0 %1810
    %v1813 = vmul.f32 %v1807, %v1811
    %1815 = vrot.lane.b32.xlu0 %v1813, 32
    %v1816 = vpop.permute.xlu0 %1815
    %v1818 = vadd.f32 %v1808, %v1816
    %v1819 = vtanh.pop %v1818
    %1821 = vrot.lane.b32.xlu0 %v1819, 64
    %v1822 = vpop.permute.xlu0 %1821
    %v1824 = vmul.f32 %v1807, %v1822
    %v1825 = vpack.c.bf16 %v1824, %v1824
    %1827 = vrot.lane.b32.xlu0 %v1825, 32
    %v1828 = vpop.permute.xlu0 %1827
    %v1830 = vsel %vm191, %v1828, 0
    %1832 = vmatprep.subr.bf16.mxu0 0
    %1833 = vmatpush1.bf16.msra.mxu0 %v1260
    %1834 = vmatprep.subr.bf16.mxu0 0
    %1835 = vmatpush1.bf16.msra.mxu0 %v1261
    %1836 = vmatprep.subr.bf16.mxu0 0
    %1837 = vmatpush1.bf16.msra.mxu0 0
    %1838 = vmatprep.subr.bf16.mxu0 0
    %1839 = vmatpush1.bf16.msra.mxu0 0
    %1840 = vmatprep.subr.bf16.mxu0 0
    %1841 = vmatpush1.bf16.msra.mxu0 0
    %1842 = vmatprep.subr.bf16.mxu0 0
    %1843 = vmatpush1.bf16.msra.mxu0 0
    %1844 = vmatprep.subr.bf16.mxu0 0
    %1845 = vmatpush1.bf16.msra.mxu0 0
    %1846 = vmatprep.subr.bf16.mxu0 0
    %1847 = vmatpush1.bf16.msra.mxu0 0
    %1848 = vmatprep.subr.bf16.mxu0 0
    %1849 = vmatpush1.bf16.msra.mxu0 0
    %1850 = vmatprep.subr.bf16.mxu0 0
    %1851 = vmatpush1.bf16.msra.mxu0 0
    %1852 = vmatprep.subr.bf16.mxu0 0
    %1853 = vmatpush1.bf16.msra.mxu0 0
    %1854 = vmatprep.subr.bf16.mxu0 0
    %1855 = vmatpush1.bf16.msra.mxu0 0
    %1856 = vmatprep.subr.bf16.mxu0 0
    %1857 = vmatpush1.bf16.msra.mxu0 0
    %1858 = vmatprep.subr.bf16.mxu0 0
    %1859 = vmatpush1.bf16.msra.mxu0 0
    %1860 = vmatprep.subr.bf16.mxu0 0
    %1861 = vmatpush1.bf16.msra.mxu0 0
    %1862 = vmatprep.subr.bf16.mxu0 0
    %1863 = vmatpush1.bf16.msra.mxu0 0
    %1864 = vmatprep.mubr.bf16.mxu0 0
    %1865 = vmatmul.mubr.bf16.gmra.mrb[0].mxu0 %v1830
    %v1866 = vpop.f32.mrb[0].mxu0
    %v1867 = vadd.f32 %v120, %v1866
    %v1868 = vpop.f32.mrb[0].mxu0
    %v1869 = vpop.f32.mrb[0].mxu0
    %v1870 = vpop.f32.mrb[0].mxu0
    %1871 = vdwg.mxu0
    %1872 = vmatprep.subr.bf16.mxu0 0
    %1873 = vmatpush1.bf16.msra.mxu0 %v1175
    %1874 = vmatprep.subr.bf16.mxu0 0
    %1875 = vmatpush1.bf16.msra.mxu0 %v1176
    %1876 = vmatprep.subr.bf16.mxu0 0
    %1877 = vmatpush1.bf16.msra.mxu0 0
    %1878 = vmatprep.subr.bf16.mxu0 0
    %1879 = vmatpush1.bf16.msra.mxu0 0
    %1880 = vmatprep.subr.bf16.mxu0 0
    %1881 = vmatpush1.bf16.msra.mxu0 0
    %1882 = vmatprep.subr.bf16.mxu0 0
    %1883 = vmatpush1.bf16.msra.mxu0 0
    %1884 = vmatprep.subr.bf16.mxu0 0
    %1885 = vmatpush1.bf16.msra.mxu0 0
    %1886 = vmatprep.subr.bf16.mxu0 0
    %1887 = vmatpush1.bf16.msra.mxu0 0
    %1888 = vmatprep.subr.bf16.mxu0 0
    %1889 = vmatpush1.bf16.msra.mxu0 0
    %1890 = vmatprep.subr.bf16.mxu0 0
    %1891 = vmatpush1.bf16.msra.mxu0 0
    %1892 = vmatprep.subr.bf16.mxu0 0
    %1893 = vmatpush1.bf16.msra.mxu0 0
    %1894 = vmatprep.subr.bf16.mxu0 0
    %1895 = vmatpush1.bf16.msra.mxu0 0
    %1896 = vmatprep.subr.bf16.mxu0 0
    %1897 = vmatpush1.bf16.msra.mxu0 0
    %1898 = vmatprep.subr.bf16.mxu0 0
    %1899 = vmatpush1.bf16.msra.mxu0 0
    %1900 = vmatprep.subr.bf16.mxu0 0
    %1901 = vmatpush1.bf16.msra.mxu0 0
    %1902 = vmatprep.subr.bf16.mxu0 0
    %1903 = vmatpush1.bf16.msra.mxu0 0
    %1904 = vmatprep.mubr.bf16.mxu0 0
    %1905 = vmatmul.mubr.bf16.gmra.mrb[0].mxu0 %v1830
    %v1906 = vpop.f32.mrb[0].mxu0
    %v1907 = vadd.f32 0.0, %v1906
    %v1908 = vpop.f32.mrb[0].mxu0
    %v1909 = vpop.f32.mrb[0].mxu0
    %v1910 = vpop.f32.mrb[0].mxu0
    %1911 = vdwg.mxu0
    %v1912 = vadd.f32 %v1040, %v1907
    %v1913 = vtanh.pop %v1912
    %v1914 = vxor.u32 %v1912, 2147483648
    %v1915 = vmul.f32 %v1914, 1.442695
    %v1916 = vpow.pop %v1915
    %v1917 = vadd.f32 %v1916, 1.0
    %v1918 = vrcp.pop %v1917
    %v1919 = vmul.f32 1.0, %v1918
    %v1920 = vsel %vm102, %v1913, %v1919
    %v1921 = vmul.f32 %v1920, %v1818
    %1923 = vrot.lane.b32.xlu0 %v1920, 64
    %v1924 = vpop.permute.xlu0 %1923
    %v1926 = vmul.f32 %v1920, %v1924
    %1928 = vrot.lane.b32.xlu0 %v1926, 32
    %v1929 = vpop.permute.xlu0 %1928
    %v1931 = vadd.f32 %v1921, %v1929
    %v1932 = vtanh.pop %v1931
    %1934 = vrot.lane.b32.xlu0 %v1932, 64
    %v1935 = vpop.permute.xlu0 %1934
    %v1937 = vmul.f32 %v1920, %v1935
    %v1938 = vpack.c.bf16 %v1937, %v1937
    %1940 = vrot.lane.b32.xlu0 %v1938, 32
    %v1941 = vpop.permute.xlu0 %1940
    %v1943 = vsel %vm191, %v1941, 0
    %1945 = vmatprep.subr.bf16.mxu0 0
    %1946 = vmatpush1.bf16.msra.mxu0 %v1260
    %1947 = vmatprep.subr.bf16.mxu0 0
    %1948 = vmatpush1.bf16.msra.mxu0 %v1261
    %1949 = vmatprep.subr.bf16.mxu0 0
    %1950 = vmatpush1.bf16.msra.mxu0 0
    %1951 = vmatprep.subr.bf16.mxu0 0
    %1952 = vmatpush1.bf16.msra.mxu0 0
    %1953 = vmatprep.subr.bf16.mxu0 0
    %1954 = vmatpush1.bf16.msra.mxu0 0
    %1955 = vmatprep.subr.bf16.mxu0 0
    %1956 = vmatpush1.bf16.msra.mxu0 0
    %1957 = vmatprep.subr.bf16.mxu0 0
    %1958 = vmatpush1.bf16.msra.mxu0 0
    %1959 = vmatprep.subr.bf16.mxu0 0
    %1960 = vmatpush1.bf16.msra.mxu0 0
    %1961 = vmatprep.subr.bf16.mxu0 0
    %1962 = vmatpush1.bf16.msra.mxu0 0
    %1963 = vmatprep.subr.bf16.mxu0 0
    %1964 = vmatpush1.bf16.msra.mxu0 0
    %1965 = vmatprep.subr.bf16.mxu0 0
    %1966 = vmatpush1.bf16.msra.mxu0 0
    %1967 = vmatprep.subr.bf16.mxu0 0
    %1968 = vmatpush1.bf16.msra.mxu0 0
    %1969 = vmatprep.subr.bf16.mxu0 0
    %1970 = vmatpush1.bf16.msra.mxu0 0
    %1971 = vmatprep.subr.bf16.mxu0 0
    %1972 = vmatpush1.bf16.msra.mxu0 0
    %1973 = vmatprep.subr.bf16.mxu0 0
    %1974 = vmatpush1.bf16.msra.mxu0 0
    %1975 = vmatprep.subr.bf16.mxu0 0
    %1976 = vmatpush1.bf16.msra.mxu0 0
    %1977 = vmatprep.mubr.bf16.mxu0 0
    %1978 = vmatmul.mubr.bf16.gmra.mrb[0].mxu0 %v1943
    %v1979 = vpop.f32.mrb[0].mxu0
    %v1980 = vadd.f32 %v120, %v1979
    %v1981 = vpop.f32.mrb[0].mxu0
    %v1982 = vpop.f32.mrb[0].mxu0
    %v1983 = vpop.f32.mrb[0].mxu0
    %1984 = vdwg.mxu0
    %1985 = vmatprep.subr.bf16.mxu0 0
    %1986 = vmatpush1.bf16.msra.mxu0 %v1175
    %1987 = vmatprep.subr.bf16.mxu0 0
    %1988 = vmatpush1.bf16.msra.mxu0 %v1176
    %1989 = vmatprep.subr.bf16.mxu0 0
    %1990 = vmatpush1.bf16.msra.mxu0 0
    %1991 = vmatprep.subr.bf16.mxu0 0
    %1992 = vmatpush1.bf16.msra.mxu0 0
    %1993 = vmatprep.subr.bf16.mxu0 0
    %1994 = vmatpush1.bf16.msra.mxu0 0
    %1995 = vmatprep.subr.bf16.mxu0 0
    %1996 = vmatpush1.bf16.msra.mxu0 0
    %1997 = vmatprep.subr.bf16.mxu0 0
    %1998 = vmatpush1.bf16.msra.mxu0 0
    %1999 = vmatprep.subr.bf16.mxu0 0
    %2000 = vmatpush1.bf16.msra.mxu0 0
    %2001 = vmatprep.subr.bf16.mxu0 0
    %2002 = vmatpush1.bf16.msra.mxu0 0
    %2003 = vmatprep.subr.bf16.mxu0 0
    %2004 = vmatpush1.bf16.msra.mxu0 0
    %2005 = vmatprep.subr.bf16.mxu0 0
    %2006 = vmatpush1.bf16.msra.mxu0 0
    %2007 = vmatprep.subr.bf16.mxu0 0
    %2008 = vmatpush1.bf16.msra.mxu0 0
    %2009 = vmatprep.subr.bf16.mxu0 0
    %2010 = vmatpush1.bf16.msra.mxu0 0
    %2011 = vmatprep.subr.bf16.mxu0 0
    %2012 = vmatpush1.bf16.msra.mxu0 0
    %2013 = vmatprep.subr.bf16.mxu0 0
    %2014 = vmatpush1.bf16.msra.mxu0 0
    %2015 = vmatprep.subr.bf16.mxu0 0
    %2016 = vmatpush1.bf16.msra.mxu0 0
    %2017 = vmatprep.mubr.bf16.mxu0 0
    %2018 = vmatmul.mubr.bf16.gmra.mrb[0].mxu0 %v1943
    %v2019 = vpop.f32.mrb[0].mxu0
    %v2020 = vadd.f32 0.0, %v2019
    %v2021 = vpop.f32.mrb[0].mxu0
    %v2022 = vpop.f32.mrb[0].mxu0
    %v2023 = vpop.f32.mrb[0].mxu0
    %2024 = vdwg.mxu0
    %v2025 = vadd.f32 %v1162, %v2020
    %v2026 = vtanh.pop %v2025
    %v2027 = vxor.u32 %v2025, 2147483648
    %v2028 = vmul.f32 %v2027, 1.442695
    %v2029 = vpow.pop %v2028
    %v2030 = vadd.f32 %v2029, 1.0
    %v2031 = vrcp.pop %v2030
    %v2032 = vmul.f32 1.0, %v2031
    %v2033 = vsel %vm102, %v2026, %v2032
    %v2034 = vmul.f32 %v2033, %v1931
    %2036 = vrot.lane.b32.xlu0 %v2033, 64
    %v2037 = vpop.permute.xlu0 %2036
    %v2039 = vmul.f32 %v2033, %v2037
    %2041 = vrot.lane.b32.xlu0 %v2039, 32
    %v2042 = vpop.permute.xlu0 %2041
    %v2044 = vadd.f32 %v2034, %v2042
    %v2045 = vtanh.pop %v2044
    %2047 = vrot.lane.b32.xlu0 %v2045, 64
    %v2048 = vpop.permute.xlu0 %2047
    %v2050 = vmul.f32 %v2033, %v2048
    %v2051 = vpack.c.bf16 %v2050, %v2050
    %2053 = vrot.lane.b32.xlu0 %v2051, 32
    %v2054 = vpop.permute.xlu0 %2053
    %v2056 = vsel %vm191, %v2054, 0
    %2058 = vmatprep.subr.bf16.mxu0 0
    %2059 = vmatpush1.bf16.msra.mxu0 %v1260
    %2060 = vmatprep.subr.bf16.mxu0 0
    %2061 = vmatpush1.bf16.msra.mxu0 %v1261
    %2062 = vmatprep.subr.bf16.mxu0 0
    %2063 = vmatpush1.bf16.msra.mxu0 0
    %2064 = vmatprep.subr.bf16.mxu0 0
    %2065 = vmatpush1.bf16.msra.mxu0 0
    %2066 = vmatprep.subr.bf16.mxu0 0
    %2067 = vmatpush1.bf16.msra.mxu0 0
    %2068 = vmatprep.subr.bf16.mxu0 0
    %2069 = vmatpush1.bf16.msra.mxu0 0
    %2070 = vmatprep.subr.bf16.mxu0 0
    %2071 = vmatpush1.bf16.msra.mxu0 0
    %2072 = vmatprep.subr.bf16.mxu0 0
    %2073 = vmatpush1.bf16.msra.mxu0 0
    %2074 = vmatprep.subr.bf16.mxu0 0
    %2075 = vmatpush1.bf16.msra.mxu0 0
    %2076 = vmatprep.subr.bf16.mxu0 0
    %2077 = vmatpush1.bf16.msra.mxu0 0
    %2078 = vmatprep.subr.bf16.mxu0 0
    %2079 = vmatpush1.bf16.msra.mxu0 0
    %2080 = vmatprep.subr.bf16.mxu0 0
    %2081 = vmatpush1.bf16.msra.mxu0 0
    %2082 = vmatprep.subr.bf16.mxu0 0
    %2083 = vmatpush1.bf16.msra.mxu0 0
    %2084 = vmatprep.subr.bf16.mxu0 0
    %2085 = vmatpush1.bf16.msra.mxu0 0
    %2086 = vmatprep.subr.bf16.mxu0 0
    %2087 = vmatpush1.bf16.msra.mxu0 0
    %2088 = vmatprep.subr.bf16.mxu0 0
    %2089 = vmatpush1.bf16.msra.mxu0 0
    %2090 = vmatprep.mubr.bf16.mxu0 0
    %2091 = vmatmul.mubr.bf16.gmra.mrb[0].mxu0 %v2056
    %v2092 = vpop.f32.mrb[0].mxu0
    %v2093 = vadd.f32 %v120, %v2092
    %v2094 = vpop.f32.mrb[0].mxu0
    %v2095 = vpop.f32.mrb[0].mxu0
    %v2096 = vpop.f32.mrb[0].mxu0
    %2097 = vdwg.mxu0
    %v2099 = vrot.slane %v1415, 7
    %v2102 = vrot.slane %v1528, 6
    %v2105 = vrot.slane %v1641, 5
    %v2108 = vrot.slane %v1754, 4
    %v2111 = vrot.slane %v1867, 3
    %v2114 = vrot.slane %v1980, 2
    %v2117 = vrot.slane %v2093, 1
    %vm2119 = vcmask 1040384
    %v2120 = vsel %vm2119, %v1302, %v2099
    %vm2121 = vcmask 1041408
    %v2122 = vsel %vm2121, %v2120, %v2102
    %vm2123 = vcmask 1042432
    %v2124 = vsel %vm2123, %v2122, %v2105
    %v2125 = vsel %vm135, %v2124, %v2108
    %vm2126 = vcmask 1044480
    %v2127 = vsel %vm2126, %v2125, %v2111
    %vm2128 = vcmask 1045504
    %v2129 = vsel %vm2128, %v2127, %v2114
    %vm2130 = vcmask 1046528
    %v2131 = vsel %vm2130, %v2129, %v2117
    %2132 = vst [vmem:[#allocation11] sm:$0xff] %v2131
    // Predicated region
    $region58: #{tpu_custom_call.1} parent=1 // pred_check
      _
    $region59: #{tpu_custom_call.1} parent=1 // pred_check_branch
      %2134 = sbr.rel (0) target = $region61
    $region60: #{tpu_custom_call.1} parent=1 // pred_region
      %s2136 = ssub.s32 128, 128
      %2137 = vsyncadd [#allocation4], %s2136
      %s2139 = sshll.u32 [#allocation11], 4
      %s2140 = int_to_ptr.vmem [resolvable:$true] %s2139
      %2142 = dma.vmem_to_hbm [thread:$0]  %s2140, 128, %s9, [#allocation4]
    $region61: #{tpu_custom_call.1} parent=1 // pred_fallthru
      _
    // Predicated region
    $region62: #{tpu_custom_call.1} parent=1 // pred_check
      _
    $region63: #{tpu_custom_call.1} parent=1 // pred_check_branch
      %2144 = sbr.rel (0) target = $region65
    $region64: #{tpu_custom_call.1} parent=1 // pred_region
      %2145 = dma.done [#allocation4], 128
    $region65: #{tpu_custom_call.1} parent=1 // pred_fallthru
      _
    %2146 = vsyncpa [#allocation3], 1
    %2147 = vsyncpa [#allocation6], 1
    %2148 = vsyncpa [#allocation9], 1
    %2149 = vsyncpa [#allocation4], 1

</llo_original>
